<compile_context>
chip_gen: v7x
topology: tpu7x:2x2x1
jax: 0.10.0
libtpu: 0.0.40
codegen_flags: <defaults>
</compile_context>

<pallas_src>
import functools

import jax
import jax.numpy as jnp
from jax.experimental import pallas as pl
from jax.experimental.pallas import tpu as pltpu

LEAKY_SLOPE = 0.01  # nn.LeakyReLU default negative_slope
LANES = 128
HIDDEN_DIMS = (32, 16, 8)
IN_DIM = 94


def _leaky_relu(x):
    return jnp.where(x >= 0, x, LEAKY_SLOPE * x)


def _round_up(n, m):
    return ((n + m - 1) // m) * m


# -----------------------------------------------------------------------------
# Chip-generation profile (best effort; conservative fallback).
#   returns (vmem_budget_bytes, num_tensorcores, default_batch_tile)
# -----------------------------------------------------------------------------
def _chip_profile():
    kind = ""
    try:
        kind = (getattr(jax.devices()[0], "device_kind", "") or "").lower()
    except Exception:
        pass
    if "v7" in kind:                        # 2 TCs/chip, 64 MiB physical VMEM/TC
        return 48 << 20, 2, 8192
    if "v6" in kind or "trillium" in kind:  # 1 TC, 128 MiB physical VMEM
        return 64 << 20, 1, 8192
    if "lite" in kind or "v5e" in kind:     # v5e: 1 TC, 128 MiB physical VMEM
        return 48 << 20, 1, 4096
    if "v5" in kind or "v4" in kind:        # v5p / v4: megacore (2 TCs)
        return 48 << 20, 2, 8192
    return 32 << 20, 1, 4096                # unknown: conservative


# -----------------------------------------------------------------------------
# Parameter packing: all weights+biases -> one sublane-aligned (rows, 128) slab.
# Each block is [W (fan_in rows) ; b (1 row)], row-padded to a multiple of 8 and
# lane-padded to 128, so every slice offset lands on an (8,128) tile boundary.
#   enc1: (94+1, 32) | enc2: (32+1, 16) | enc3: (16+1, 8)
#   muvar: (8+1, 2*latent)   (fc_mu | fc_var concatenated on lanes)
#   dec:   (latent+1, latent)
# -----------------------------------------------------------------------------
def _slab_layout(latent_dim):
    shapes = [
        (IN_DIM, HIDDEN_DIMS[0]),
        (HIDDEN_DIMS[0], HIDDEN_DIMS[1]),
        (HIDDEN_DIMS[1], HIDDEN_DIMS[2]),
        (HIDDEN_DIMS[2], 2 * latent_dim),   # fused fc_mu | fc_var
        (latent_dim, latent_dim),           # decoder
    ]
    offsets = []
    r = 0
    for fan_in, fan_out in shapes:
        offsets.append((r, fan_in, fan_out))
        r += _round_up(fan_in + 1, 8)       # 8-row (sublane) aligned blocks
    return shapes, offsets, r


def pack_params(params, latent_dim):
    (w1, b1), (w2, b2), (w3, b3), (wmu, bmu), (wvar, bvar), (wdec, bdec) = params
    wmv = jnp.concatenate([wmu, wvar], axis=1)     # (8, 2*latent)
    bmv = jnp.concatenate([bmu, bvar], axis=1)     # (1, 2*latent)
    packed = [(w1, b1), (w2, b2), (w3, b3), (wmv, bmv), (wdec, bdec)]

    blocks = []
    for w, b in packed:
        fan_in, fan_out = w.shape
        rows = _round_up(fan_in + 1, 8)
        wb = jnp.concatenate([w, b.reshape(1, fan_out)], axis=0)       # (fan_in+1, fan_out)
        wb = jnp.pad(wb, ((0, rows - (fan_in + 1)), (0, LANES - fan_out)))
        blocks.append(wb)
    slab = jnp.concatenate(blocks, axis=0).astype(jnp.float32)          # (total_rows, 128)
    return slab


# -----------------------------------------------------------------------------
# Kernel
# -----------------------------------------------------------------------------
def cvae_kernel(x_ref, eps_ref, p_ref, out_ref, *, latent_dim):
    L = latent_dim
    _, offsets, _ = _slab_layout(L)

    def wb(idx):
        # Slice the *ref* directly (offsets are 8-row aligned) -- no whole-slab
        # materialization, no shifted VMEM copies.
        r, fan_in, fan_out = offsets[idx]
        w = p_ref[r:r + fan_in, 0:fan_out]
        b = p_ref[r + fan_in:r + fan_in + 1, 0:fan_out]
        return w, b

    x = x_ref[...].astype(jnp.float32)       # (TB, 94); bf16 inputs cast in-VMEM

    # ---- encoder: 3x (Linear + LeakyReLU) ----
    w1, b1 = wb(0)
    h = _leaky_relu(jnp.dot(x, w1, preferred_element_type=jnp.float32) + b1)
    w2, b2 = wb(1)
    h = _leaky_relu(jnp.dot(h, w2, preferred_element_type=jnp.float32) + b2)
    w3, b3 = wb(2)
    h = _leaky_relu(jnp.dot(h, w3, preferred_element_type=jnp.float32) + b3)

    # ---- fused fc_mu | fc_var: one matmul, slice ----
    wmv, bmv = wb(3)
    mv = jnp.dot(h, wmv, preferred_element_type=jnp.float32) + bmv     # (TB, 2L)
    mu = mv[:, 0:L]
    logvar = mv[:, L:2 * L]

    # ---- reparameterize: z = eps * exp(0.5*logvar) + mu ----
    z = eps_ref[...].astype(jnp.float32) * jnp.exp(0.5 * logvar) + mu

    # ---- decoder: Linear(latent, latent) ----
    wd, bd = wb(4)
    recon = jnp.dot(z, wd, preferred_element_type=jnp.float32) + bd

    # ---- single fused output store: [recon | mu | logvar] ----
    # mu|logvar are already adjacent lanes inside mv -> only one lane stitch.
    out_ref[...] = jnp.concatenate([recon, mv], axis=1).astype(out_ref.dtype)


# -----------------------------------------------------------------------------
# Wrapper
# -----------------------------------------------------------------------------
def cvae_forward(x, eps, params, *, batch_tile=None):
    """x: (B, 94), eps: (B, latent). Returns (recon, mu, logvar).

    x / eps may be f32 or bf16 (bf16 halves the dominant HBM read; the dots
    still accumulate in f32).  No wrapper-side casts/pads of x or eps: any
    extra HBM pass over x would negate the win on this HBM-read-bound kernel.
    """
    B, in_dim = x.shape
    assert in_dim == IN_DIM
    L = eps.shape[1]
    assert 2 * L <= LANES, "fused mu|var block must fit in one 128-lane tile"

    slab = pack_params(params, L)
    slab_rows = slab.shape[0]

    vmem_budget, n_tc, default_tile = _chip_profile()

    # ---- real per-row VMEM cost (lane padding to 128 counts): -------------
    # each pipelined stream (x, eps, out) buffers tb rows x 128 lanes per
    # buffer regardless of logical width (94 / L / 3L), double-buffered;
    # plus headroom for ~4 lane-padded f32 in-kernel temporaries per row.
    x_item = x.dtype.itemsize
    e_item = eps.dtype.itemsize
    o_item = 4
    per_row = 2 * LANES * (x_item + e_item + o_item) + 4 * LANES * 4
    slab_bytes = 2 * slab_rows * LANES * slab.dtype.itemsize

    max_tb = max(8, (((vmem_budget - slab_bytes - (2 << 20)) // per_row) // 8) * 8)
    cap = batch_tile if batch_tile is not None else default_tile
    cap = max(8, min(_round_up(cap, 8), max_tb))

    # ---- tile / grid selection: NO wrapper-side padding of x/eps. ---------
    # grid = cdiv(B, tb); edge-block writes are masked by Pallas and the
    # out_shape is exactly (B, 3L), so garbage edge reads never surface.
    min_tiles = n_tc if (n_tc > 1 and B > 8 * n_tc) else 1
    tiles = max(min_tiles, pl.cdiv(B, cap))
    if n_tc > 1 and tiles > 1:
        tiles = _round_up(tiles, n_tc)          # equal work for both TCs
    tb = min(cap, _round_up(pl.cdiv(B, tiles), 8))
    tiles = pl.cdiv(B, tb)
    if tiles == 1:
        tb = B                                  # exact single block, no edge

    vmem_need = tb * per_row + slab_bytes + (2 << 20)
    vmem_limit = int(min(max(vmem_need, 16 << 20), vmem_budget))

    grid = (tiles,)
    in_specs = [
        pl.BlockSpec((tb, IN_DIM), lambda i: (i, 0)),         # x (batch-tiled)
        pl.BlockSpec((tb, L), lambda i: (i, 0)),              # eps (batch-tiled)
        pl.BlockSpec((slab_rows, LANES), lambda i: (0, 0)),   # params, fetched once
    ]
    out_specs = pl.BlockSpec((tb, 3 * L), lambda i: (i, 0))
    out_shape = jax.ShapeDtypeStruct((B, 3 * L), jnp.float32)

    flops_per_row = 2 * (IN_DIM * HIDDEN_DIMS[0]
                         + HIDDEN_DIMS[0] * HIDDEN_DIMS[1]
                         + HIDDEN_DIMS[1] * HIDDEN_DIMS[2]
                         + HIDDEN_DIMS[2] * 2 * L
                         + L * L)
    cost = pl.CostEstimate(
        flops=B * flops_per_row,
        transcendentals=B * L,
        bytes_accessed=B * (IN_DIM * x_item + L * e_item + 3 * L * o_item)
                       + slab.size * slab.dtype.itemsize,
    )

    out = pl.pallas_call(
        functools.partial(cvae_kernel, latent_dim=L),
        out_shape=out_shape,
        grid_spec=pltpu.PrefetchScalarGridSpec(
            num_scalar_prefetch=0,
            grid=grid,
            in_specs=in_specs,
            out_specs=out_specs,
        ),
        compiler_params=pltpu.CompilerParams(
            dimension_semantics=("parallel",),
            vmem_limit_bytes=vmem_limit,
        ),
        cost_estimate=cost,
    )(x, eps, slab)

    recon = out[:, 0:L]
    mu = out[:, L:2 * L]
    logvar = out[:, 2 * L:3 * L]
    return recon, mu, logvar


# -----------------------------------------------------------------------------
# Init + pure-JAX reference (for correctness check)
# -----------------------------------------------------------------------------
def init_params(key, latent_dim):
    """PyTorch-Linear-style uniform init. Weights stored [in, out], biases [1, out]."""
    dims = [(IN_DIM, HIDDEN_DIMS[0]),
            (HIDDEN_DIMS[0], HIDDEN_DIMS[1]),
            (HIDDEN_DIMS[1], HIDDEN_DIMS[2]),
            (HIDDEN_DIMS[2], latent_dim),   # fc_mu
            (HIDDEN_DIMS[2], latent_dim),   # fc_var
            (latent_dim, latent_dim)]       # decoder

    params = []
    for fan_in, fan_out in dims:
        key, kw, kb = jax.random.split(key, 3)
        bound = 1.0 / jnp.sqrt(fan_in)
        w = jax.random.uniform(kw, (fan_in, fan_out), jnp.float32, -bound, bound)
        b = jax.random.uniform(kb, (1, fan_out), jnp.float32, -bound, bound)
        params.append((w, b))
    return params


def cvae_reference(x, eps, params):
    (w1, b1), (w2, b2), (w3, b3), (wmu, bmu), (wvar, bvar), (wdec, bdec) = params
    h = _leaky_relu(x @ w1 + b1)
    h = _leaky_relu(h @ w2 + b2)
    h = _leaky_relu(h @ w3 + b3)
    mu = h @ wmu + bmu
    logvar = h @ wvar + bvar
    z = eps * jnp.exp(0.5 * logvar) + mu
    return z @ wdec + bdec, mu, logvar


if __name__ == "__main__":
    latent_dim = 4
    B = 200   # deliberately not tile-divisible: exercises edge-block masking

    root = jax.random.PRNGKey(0)
    kx, keps, kp = jax.random.split(root, 3)

    x = jax.random.normal(kx, (B, IN_DIM), jnp.float32)
    eps = jax.random.normal(keps, (B, latent_dim), jnp.float32)
    params = init_params(kp, latent_dim)

    r_ref, mu_ref, lv_ref = cvae_reference(x, eps, params)

    # 1) gen-default tiling (single big tile on 1-TC chips, 2-way on 2-TC parts)
    recon, mu, logvar = cvae_forward(x, eps, params)
    jax.block_until_ready((recon, mu, logvar))
    assert jnp.allclose(recon, r_ref, atol=1e-5, rtol=1e-5)
    assert jnp.allclose(mu, mu_ref, atol=1e-5, rtol=1e-5)
    assert jnp.allclose(logvar, lv_ref, atol=1e-5, rtol=1e-5)

    # 2) small forced tile: multi-step grid + partially-masked edge block
    recon2, mu2, logvar2 = cvae_forward(x, eps, params, batch_tile=64)
    jax.block_until_ready((recon2, mu2, logvar2))
    assert jnp.allclose(recon2, r_ref, atol=1e-5, rtol=1e-5)
    assert jnp.allclose(mu2, mu_ref, atol=1e-5, rtol=1e-5)
    assert jnp.allclose(logvar2, lv_ref, atol=1e-5, rtol=1e-5)

    print("KERNEL_OK")
</pallas_src>

<mosaic_0001>
module attributes {stable_mosaic.version = 11 : i64} {
  func.func @cvae_kernel(%arg0: i32, %arg1: memref<200x94xf32, #tpu.memory_space<vmem>>, %arg2: memref<200x4xf32, #tpu.memory_space<vmem>>, %arg3: memref<184x128xf32, #tpu.memory_space<vmem>>, %arg4: memref<200x12xf32, #tpu.memory_space<vmem>>) attributes {dimension_semantics = [#tpu.dimension_semantics<parallel>], iteration_bounds = array<i64: 1>, scalar_prefetch = 0 : i64, scratch_operands = 0 : i64, tpu.core_type = #tpu.core_type<tc>, window_params = [{transform_indices = @transform_0, window_bounds = array<i64: 200, 94>}, {transform_indices = @transform_1, window_bounds = array<i64: 200, 4>}, {pipeline_mode = #tpu.pipeline_mode<synchronous>, transform_indices = @transform_2, window_bounds = array<i64: 184, 128>}, {transform_indices = @transform_3, window_bounds = array<i64: 200, 12>}]} {
    %c0 = arith.constant 0 : index
    %c0_0 = arith.constant 0 : index
    %0 = vector.load %arg1[%c0, %c0_0] : memref<200x94xf32, #tpu.memory_space<vmem>>, vector<200x94xf32>
    %c0_1 = arith.constant 0 : index
    %c0_2 = arith.constant 0 : index
    %1 = vector.load %arg3[%c0_1, %c0_2] : memref<184x128xf32, #tpu.memory_space<vmem>>, vector<94x32xf32>
    %c94 = arith.constant 94 : index
    %c0_3 = arith.constant 0 : index
    %2 = vector.load %arg3[%c94, %c0_3] : memref<184x128xf32, #tpu.memory_space<vmem>>, vector<1x32xf32>
    %cst = arith.constant dense<0.000000e+00> : vector<200x32xf32>
    %3 = tpu.matmul %0, %1, %cst {dimension_numbers = #tpu.dot_dimension_numbers<[1], [0], [0], [1], [0, 0, 1, 1], [], []>} : vector<200x94xf32>, vector<94x32xf32>, vector<200x32xf32> -> vector<200x32xf32>
    %4 = vector.broadcast %2 : vector<1x32xf32> to vector<200x32xf32>
    %5 = arith.addf %3, %4 : vector<200x32xf32>
    %cst_4 = arith.constant 0.000000e+00 : f32
    %6 = vector.broadcast %cst_4 : f32 to vector<200x32xf32>
    %7 = arith.cmpf oge, %5, %6 : vector<200x32xf32>
    %cst_5 = arith.constant 0.00999999977 : f32
    %8 = vector.broadcast %cst_5 : f32 to vector<200x32xf32>
    %9 = arith.mulf %8, %5 : vector<200x32xf32>
    %10 = arith.select %7, %5, %9 : vector<200x32xi1>, vector<200x32xf32>
    %c96 = arith.constant 96 : index
    %c0_6 = arith.constant 0 : index
    %11 = vector.load %arg3[%c96, %c0_6] : memref<184x128xf32, #tpu.memory_space<vmem>>, vector<32x16xf32>
    %c128 = arith.constant 128 : index
    %c0_7 = arith.constant 0 : index
    %12 = vector.load %arg3[%c128, %c0_7] : memref<184x128xf32, #tpu.memory_space<vmem>>, vector<1x16xf32>
    %cst_8 = arith.constant dense<0.000000e+00> : vector<200x16xf32>
    %13 = tpu.matmul %10, %11, %cst_8 {dimension_numbers = #tpu.dot_dimension_numbers<[1], [0], [0], [1], [0, 0, 1, 1], [], []>} : vector<200x32xf32>, vector<32x16xf32>, vector<200x16xf32> -> vector<200x16xf32>
    %14 = vector.broadcast %12 : vector<1x16xf32> to vector<200x16xf32>
    %15 = arith.addf %13, %14 : vector<200x16xf32>
    %cst_9 = arith.constant 0.000000e+00 : f32
    %16 = vector.broadcast %cst_9 : f32 to vector<200x16xf32>
    %17 = arith.cmpf oge, %15, %16 : vector<200x16xf32>
    %cst_10 = arith.constant 0.00999999977 : f32
    %18 = vector.broadcast %cst_10 : f32 to vector<200x16xf32>
    %19 = arith.mulf %18, %15 : vector<200x16xf32>
    %20 = arith.select %17, %15, %19 : vector<200x16xi1>, vector<200x16xf32>
    %c136 = arith.constant 136 : index
    %c0_11 = arith.constant 0 : index
    %21 = vector.load %arg3[%c136, %c0_11] : memref<184x128xf32, #tpu.memory_space<vmem>>, vector<16x8xf32>
    %c152 = arith.constant 152 : index
    %c0_12 = arith.constant 0 : index
    %22 = vector.load %arg3[%c152, %c0_12] : memref<184x128xf32, #tpu.memory_space<vmem>>, vector<1x8xf32>
    %cst_13 = arith.constant dense<0.000000e+00> : vector<200x8xf32>
    %23 = tpu.matmul %20, %21, %cst_13 {dimension_numbers = #tpu.dot_dimension_numbers<[1], [0], [0], [1], [0, 0, 1, 1], [], []>} : vector<200x16xf32>, vector<16x8xf32>, vector<200x8xf32> -> vector<200x8xf32>
    %24 = vector.broadcast %22 : vector<1x8xf32> to vector<200x8xf32>
    %25 = arith.addf %23, %24 : vector<200x8xf32>
    %cst_14 = arith.constant 0.000000e+00 : f32
    %26 = vector.broadcast %cst_14 : f32 to vector<200x8xf32>
    %27 = arith.cmpf oge, %25, %26 : vector<200x8xf32>
    %cst_15 = arith.constant 0.00999999977 : f32
    %28 = vector.broadcast %cst_15 : f32 to vector<200x8xf32>
    %29 = arith.mulf %28, %25 : vector<200x8xf32>
    %30 = arith.select %27, %25, %29 : vector<200x8xi1>, vector<200x8xf32>
    %c160 = arith.constant 160 : index
    %c0_16 = arith.constant 0 : index
    %31 = vector.load %arg3[%c160, %c0_16] : memref<184x128xf32, #tpu.memory_space<vmem>>, vector<8x8xf32>
    %c168 = arith.constant 168 : index
    %c0_17 = arith.constant 0 : index
    %32 = vector.load %arg3[%c168, %c0_17] : memref<184x128xf32, #tpu.memory_space<vmem>>, vector<1x8xf32>
    %cst_18 = arith.constant dense<0.000000e+00> : vector<200x8xf32>
    %33 = tpu.matmul %30, %31, %cst_18 {dimension_numbers = #tpu.dot_dimension_numbers<[1], [0], [0], [1], [0, 0, 1, 1], [], []>} : vector<200x8xf32>, vector<8x8xf32>, vector<200x8xf32> -> vector<200x8xf32>
    %34 = vector.broadcast %32 : vector<1x8xf32> to vector<200x8xf32>
    %35 = arith.addf %33, %34 : vector<200x8xf32>
    %36 = vector.extract_strided_slice %35 {offsets = [0, 0], sizes = [200, 4], strides = [1, 1]} : vector<200x8xf32> to vector<200x4xf32>
    %37 = vector.extract_strided_slice %35 {offsets = [0, 4], sizes = [200, 4], strides = [1, 1]} : vector<200x8xf32> to vector<200x4xf32>
    %c0_19 = arith.constant 0 : index
    %c0_20 = arith.constant 0 : index
    %38 = vector.load %arg2[%c0_19, %c0_20] : memref<200x4xf32, #tpu.memory_space<vmem>>, vector<200x4xf32>
    %cst_21 = arith.constant 5.000000e-01 : f32
    %39 = vector.broadcast %cst_21 : f32 to vector<200x4xf32>
    %40 = arith.mulf %39, %37 : vector<200x4xf32>
    %41 = math.exp %40 : vector<200x4xf32>
    %42 = arith.mulf %38, %41 : vector<200x4xf32>
    %43 = arith.addf %42, %36 : vector<200x4xf32>
    %c176 = arith.constant 176 : index
    %c0_22 = arith.constant 0 : index
    %44 = vector.load %arg3[%c176, %c0_22] : memref<184x128xf32, #tpu.memory_space<vmem>>, vector<4x4xf32>
    %c180 = arith.constant 180 : index
    %c0_23 = arith.constant 0 : index
    %45 = vector.load %arg3[%c180, %c0_23] : memref<184x128xf32, #tpu.memory_space<vmem>>, vector<1x4xf32>
    %cst_24 = arith.constant dense<0.000000e+00> : vector<200x4xf32>
    %46 = tpu.matmul %43, %44, %cst_24 {dimension_numbers = #tpu.dot_dimension_numbers<[1], [0], [0], [1], [0, 0, 1, 1], [], []>} : vector<200x4xf32>, vector<4x4xf32>, vector<200x4xf32> -> vector<200x4xf32>
    %47 = vector.broadcast %45 : vector<1x4xf32> to vector<200x4xf32>
    %48 = arith.addf %46, %47 : vector<200x4xf32>
    %49 = tpu.concatenate %48, %35 in 1 : vector<200x4xf32>, vector<200x8xf32> -> vector<200x12xf32>
    %c0_25 = arith.constant 0 : index
    %c0_26 = arith.constant 0 : index
    %50 = vector.load %arg4[%c0_25, %c0_26] : memref<200x12xf32, #tpu.memory_space<vmem>>, vector<200x12xf32>
    tpu.vector_store %arg4[%c0_25, %c0_26], %49 {strides = array<i32>} : memref<200x12xf32, #tpu.memory_space<vmem>>, vector<200x12xf32>,
    return
  }
  func.func @transform_0(%arg0: i32) -> (i32, i32) {
    %c0_i32 = arith.constant 0 : i32
    %c0_i32_0 = arith.constant 0 : i32
    return %arg0, %c0_i32 : i32, i32
  }
  func.func @transform_1(%arg0: i32) -> (i32, i32) {
    %c0_i32 = arith.constant 0 : i32
    %c0_i32_0 = arith.constant 0 : i32
    return %arg0, %c0_i32 : i32, i32
  }
  func.func @transform_2(%arg0: i32) -> (i32, i32) {
    %c0_i32 = arith.constant 0 : i32
    %c0_i32_0 = arith.constant 0 : i32
    %c0_i32_1 = arith.constant 0 : i32
    return %c0_i32, %c0_i32_0 : i32, i32
  }
  func.func @transform_3(%arg0: i32) -> (i32, i32) {
    %c0_i32 = arith.constant 0 : i32
    %c0_i32_0 = arith.constant 0 : i32
    return %arg0, %c0_i32 : i32, i32
  }
}

</mosaic_0001>

<llo_original>
// kernel: tpu_custom_call.1
$region0: #{tpu_custom_call.1}
  #allocation0 [shape = 'u32[]', space=smem, size = 0x4, offset = 0x4, fixed_abs, tag = 'smem constant byte address 0x4 - core index']
  #allocation1 [shape = 'u32[144,128]{1,0:T(1,128)}', space=vmem, size = 0x12000, scoped, tag = 'internal scratch']
  %s0 = inlined_call_operand.vmem [shape: f32[200,94], index: 0, kind: input, shape index: {}]
  %s1 = inlined_call_operand.vmem [shape: f32[200,4], index: 1, kind: input, shape index: {}]
  %s2 = inlined_call_operand.vmem [shape: f32[184,128], index: 2, kind: input, shape index: {}]
  %s3 = inlined_call_operand.vmem [shape: f32[200,12], index: 3, kind: output, shape index: {}]
  %s4 = sld [smem:[#allocation0]]
  $region22: #{tpu_custom_call.1} parent=0
    _
  %s6 = ssub.s32 1, %s4
  %s7 = scalar_select 0, %s6, %s4
  // Predicated region
  $region2: #{tpu_custom_call.1} parent=0 // pred_check
    _
  $region3: #{tpu_custom_call.1} parent=0 // pred_check_branch
    %9 = sbr.rel (0) target = $region5
  $region4: #{tpu_custom_call.1} parent=0 // pred_region
    _
  $region5: #{tpu_custom_call.1} parent=0 // pred_fallthru
    _
  // Predicated region
  $region6: #{tpu_custom_call.1} parent=0 // pred_check
    _
  $region7: #{tpu_custom_call.1} parent=0 // pred_check_branch
    %11 = sbr.rel (0) target = $region9
  $region8: #{tpu_custom_call.1} parent=0 // pred_region
    _
  $region9: #{tpu_custom_call.1} parent=0 // pred_fallthru
    _
  // Predicated region
  $region10: #{tpu_custom_call.1} parent=0 // pred_check
    _
  $region11: #{tpu_custom_call.1} parent=0 // pred_check_branch
    %13 = sbr.rel (0) target = $region13
  $region12: #{tpu_custom_call.1} parent=0 // pred_region
    _
  $region13: #{tpu_custom_call.1} parent=0 // pred_fallthru
    _
  %v14 = vld [vmem:[%s0] sm:$0xff]
  %v15 = vld [vmem:[%s0 + $0x8] sm:$0xff]
  %v16 = vld [vmem:[%s0 + $0x10] sm:$0xff]
  %v17 = vld [vmem:[%s0 + $0x18] sm:$0xff]
  %v18 = vld [vmem:[%s0 + $0x20] sm:$0xff]
  %v19 = vld [vmem:[%s0 + $0x28] sm:$0xff]
  %v20 = vld [vmem:[%s0 + $0x30] sm:$0xff]
  %v21 = vld [vmem:[%s0 + $0x38] sm:$0xff]
  %v22 = vld [vmem:[%s0 + $0x40] sm:$0xff]
  %v23 = vld [vmem:[%s0 + $0x48] sm:$0xff]
  %v24 = vld [vmem:[%s0 + $0x50] sm:$0xff]
  %v25 = vld [vmem:[%s0 + $0x58] sm:$0xff]
  %v26 = vld [vmem:[%s0 + $0x60] sm:$0xff]
  %v27 = vld [vmem:[%s0 + $0x68] sm:$0xff]
  %v28 = vld [vmem:[%s0 + $0x70] sm:$0xff]
  %v29 = vld [vmem:[%s0 + $0x78] sm:$0xff]
  %v30 = vld [vmem:[%s0 + $0x80] sm:$0xff]
  %v31 = vld [vmem:[%s0 + $0x88] sm:$0xff]
  %v32 = vld [vmem:[%s0 + $0x90] sm:$0xff]
  %v33 = vld [vmem:[%s0 + $0x98] sm:$0xff]
  %v34 = vld [vmem:[%s0 + $0xa0] sm:$0xff]
  %v35 = vld [vmem:[%s0 + $0xa8] sm:$0xff]
  %v36 = vld [vmem:[%s0 + $0xb0] sm:$0xff]
  %v37 = vld [vmem:[%s0 + $0xb8] sm:$0xff]
  %v38 = vld [vmem:[%s0 + $0xc0] sm:$0xff]
  %v39 = vld [vmem:[%s2] sm:$0xff]
  %v40 = vld [vmem:[%s2 + $0x8] sm:$0xff]
  %v41 = vld [vmem:[%s2 + $0x10] sm:$0xff]
  %v42 = vld [vmem:[%s2 + $0x18] sm:$0xff]
  %v43 = vld [vmem:[%s2 + $0x20] sm:$0xff]
  %v44 = vld [vmem:[%s2 + $0x28] sm:$0xff]
  %v45 = vld [vmem:[%s2 + $0x30] sm:$0xff]
  %v46 = vld [vmem:[%s2 + $0x38] sm:$0xff]
  %v47 = vld [vmem:[%s2 + $0x40] sm:$0xff]
  %v48 = vld [vmem:[%s2 + $0x48] sm:$0xff]
  %v49 = vld [vmem:[%s2 + $0x50] sm:$0xff]
  %v50 = vld [vmem:[%s2 + $0x58] sm:$0x3f]
  %v51 = vld [vmem:[%s2 + $0x5e] sm:$0x1]
  %v52 = vlaneseq
  %v53 = vshrl.u32 %v52, 7
  %v54 = vsub.s32 0, %v53
  %v55 = vrot.slane %v51, %v54
  %vm56 = vcmask 769024
  %v58 = vsel %vm56, %v14, 0
  %v61 = vsel %vm56, %v15, 0
  %v64 = vsel %vm56, %v16, 0
  %v67 = vsel %vm56, %v17, 0
  %v70 = vsel %vm56, %v18, 0
  %v73 = vsel %vm56, %v19, 0
  %v76 = vsel %vm56, %v20, 0
  %v79 = vsel %vm56, %v21, 0
  %v82 = vsel %vm56, %v22, 0
  %v85 = vsel %vm56, %v23, 0
  %v88 = vsel %vm56, %v24, 0
  %v91 = vsel %vm56, %v25, 0
  %v94 = vsel %vm56, %v26, 0
  %v97 = vsel %vm56, %v27, 0
  %v100 = vsel %vm56, %v28, 0
  %v103 = vsel %vm56, %v29, 0
  %v106 = vsel %vm56, %v30, 0
  %v109 = vsel %vm56, %v31, 0
  %v112 = vsel %vm56, %v32, 0
  %v115 = vsel %vm56, %v33, 0
  %v118 = vsel %vm56, %v34, 0
  %v121 = vsel %vm56, %v35, 0
  %v124 = vsel %vm56, %v36, 0
  %v127 = vsel %vm56, %v37, 0
  %v130 = vsel %vm56, %v38, 0
  %vm132 = vcmask 1045504
  %v134 = vsel %vm132, %v50, 0
  %136 = vmatprep.subr.mxu0 0.0
  %137 = vmatpush1.msra.mxu0 %v39
  %138 = vmatprep.subr.mxu0 0.0
  %139 = vmatpush1.msra.mxu0 %v40
  %140 = vmatprep.subr.mxu0 0.0
  %141 = vmatpush1.msra.mxu0 %v41
  %142 = vmatprep.subr.mxu0 0.0
  %143 = vmatpush1.msra.mxu0 %v42
  %144 = vmatprep.subr.mxu0 0.0
  %145 = vmatpush1.msra.mxu0 %v43
  %146 = vmatprep.subr.mxu0 0.0
  %147 = vmatpush1.msra.mxu0 %v44
  %148 = vmatprep.subr.mxu0 0.0
  %149 = vmatpush1.msra.mxu0 %v45
  %150 = vmatprep.subr.mxu0 0.0
  %151 = vmatpush1.msra.mxu0 %v46
  %152 = vmatprep.subr.mxu0 0.0
  %153 = vmatpush1.msra.mxu0 %v47
  %154 = vmatprep.subr.mxu0 0.0
  %155 = vmatpush1.msra.mxu0 %v48
  %156 = vmatprep.subr.mxu0 0.0
  %157 = vmatpush1.msra.mxu0 %v49
  %158 = vmatprep.subr.mxu0 0.0
  %159 = vmatpush1.msra.mxu0 %v134
  %160 = vmatprep.subr.mxu0 0.0
  %161 = vmatpush1.msra.mxu0 0.0
  %162 = vmatprep.subr.mxu0 0.0
  %163 = vmatpush1.msra.mxu0 0.0
  %164 = vmatprep.subr.mxu0 0.0
  %165 = vmatpush1.msra.mxu0 0.0
  %166 = vmatprep.subr.mxu0 0.0
  %167 = vmatpush1.msra.mxu0 0.0
  %168 = vmatprep.subr.mxu0 0.0
  %169 = vmatpush1.msra.mxu0 0.0
  %170 = vmatprep.subr.mxu0 0.0
  %171 = vmatpush1.msra.mxu0 0.0
  %172 = vmatprep.subr.mxu0 0.0
  %173 = vmatpush1.msra.mxu0 0.0
  %174 = vmatprep.subr.mxu0 0.0
  %175 = vmatpush1.msra.mxu0 0.0
  %176 = vmatprep.subr.mxu0 0.0
  %177 = vmatpush1.msra.mxu0 0.0
  %178 = vmatprep.subr.mxu0 0.0
  %179 = vmatpush1.msra.mxu0 0.0
  %180 = vmatprep.subr.mxu0 0.0
  %181 = vmatpush1.msra.mxu0 0.0
  %182 = vmatprep.subr.mxu0 0.0
  %183 = vmatpush1.msra.mxu0 0.0
  %184 = vmatprep.subr.mxu0 0.0
  %185 = vmatpush1.msra.mxu0 0.0
  %186 = vmatprep.subr.mxu0 0.0
  %187 = vmatpush1.msra.mxu0 0.0
  %188 = vmatprep.subr.mxu0 0.0
  %189 = vmatpush1.msra.mxu0 0.0
  %190 = vmatprep.subr.mxu0 0.0
  %191 = vmatpush1.msra.mxu0 0.0
  %192 = vmatprep.subr.mxu0 0.0
  %193 = vmatpush1.msra.mxu0 0.0
  %194 = vmatprep.subr.mxu0 0.0
  %195 = vmatpush1.msra.mxu0 0.0
  %196 = vmatprep.subr.mxu0 0.0
  %197 = vmatpush1.msra.mxu0 0.0
  %198 = vmatprep.subr.mxu0 0.0
  %199 = vmatpush1.msra.mxu0 0.0
  %200 = vmatprep.mubr.f32.mxu0 0.0
  %201 = vmatmul.mubr.f32.gmra.mrb[0].mxu0 %v58
  %v202 = vpop.f32.mrb[0].mxu0
  %v203 = vadd.f32 %v55, %v202
  %v204 = vpop.f32.mrb[0].mxu0
  %205 = vmatprep.mubr.f32.mxu0 0.0
  %206 = vmatmul.mubr.f32.gmra.mrb[0].mxu0 %v61
  %v207 = vpop.f32.mrb[0].mxu0
  %v208 = vadd.f32 %v55, %v207
  %v209 = vpop.f32.mrb[0].mxu0
  %210 = vmatprep.mubr.f32.mxu0 0.0
  %211 = vmatmul.mubr.f32.gmra.mrb[0].mxu0 %v64
  %v212 = vpop.f32.mrb[0].mxu0
  %v213 = vadd.f32 %v55, %v212
  %v214 = vpop.f32.mrb[0].mxu0
  %215 = vmatprep.mubr.f32.mxu0 0.0
  %216 = vmatmul.mubr.f32.gmra.mrb[0].mxu0 %v67
  %v217 = vpop.f32.mrb[0].mxu0
  %v218 = vadd.f32 %v55, %v217
  %v219 = vpop.f32.mrb[0].mxu0
  %220 = vmatprep.mubr.f32.mxu0 0.0
  %221 = vmatmul.mubr.f32.gmra.mrb[0].mxu0 %v70
  %v222 = vpop.f32.mrb[0].mxu0
  %v223 = vadd.f32 %v55, %v222
  %v224 = vpop.f32.mrb[0].mxu0
  %225 = vmatprep.mubr.f32.mxu0 0.0
  %226 = vmatmul.mubr.f32.gmra.mrb[0].mxu0 %v73
  %v227 = vpop.f32.mrb[0].mxu0
  %v228 = vadd.f32 %v55, %v227
  %v229 = vpop.f32.mrb[0].mxu0
  %230 = vmatprep.mubr.f32.mxu0 0.0
  %231 = vmatmul.mubr.f32.gmra.mrb[0].mxu0 %v76
  %v232 = vpop.f32.mrb[0].mxu0
  %v233 = vadd.f32 %v55, %v232
  %v234 = vpop.f32.mrb[0].mxu0
  %235 = vmatprep.mubr.f32.mxu0 0.0
  %236 = vmatmul.mubr.f32.gmra.mrb[0].mxu0 %v79
  %v237 = vpop.f32.mrb[0].mxu0
  %v238 = vadd.f32 %v55, %v237
  %v239 = vpop.f32.mrb[0].mxu0
  %240 = vmatprep.mubr.f32.mxu0 0.0
  %241 = vmatmul.mubr.f32.gmra.mrb[0].mxu0 %v82
  %v242 = vpop.f32.mrb[0].mxu0
  %v243 = vadd.f32 %v55, %v242
  %v244 = vpop.f32.mrb[0].mxu0
  %245 = vmatprep.mubr.f32.mxu0 0.0
  %246 = vmatmul.mubr.f32.gmra.mrb[0].mxu0 %v85
  %v247 = vpop.f32.mrb[0].mxu0
  %v248 = vadd.f32 %v55, %v247
  %v249 = vpop.f32.mrb[0].mxu0
  %250 = vmatprep.mubr.f32.mxu0 0.0
  %251 = vmatmul.mubr.f32.gmra.mrb[0].mxu0 %v88
  %v252 = vpop.f32.mrb[0].mxu0
  %v253 = vadd.f32 %v55, %v252
  %v254 = vpop.f32.mrb[0].mxu0
  %255 = vmatprep.mubr.f32.mxu0 0.0
  %256 = vmatmul.mubr.f32.gmra.mrb[0].mxu0 %v91
  %v257 = vpop.f32.mrb[0].mxu0
  %v258 = vadd.f32 %v55, %v257
  %v259 = vpop.f32.mrb[0].mxu0
  %260 = vmatprep.mubr.f32.mxu0 0.0
  %261 = vmatmul.mubr.f32.gmra.mrb[0].mxu0 %v94
  %v262 = vpop.f32.mrb[0].mxu0
  %v263 = vadd.f32 %v55, %v262
  %v264 = vpop.f32.mrb[0].mxu0
  %265 = vmatprep.mubr.f32.mxu0 0.0
  %266 = vmatmul.mubr.f32.gmra.mrb[0].mxu0 %v97
  %v267 = vpop.f32.mrb[0].mxu0
  %v268 = vadd.f32 %v55, %v267
  %v269 = vpop.f32.mrb[0].mxu0
  %270 = vmatprep.mubr.f32.mxu0 0.0
  %271 = vmatmul.mubr.f32.gmra.mrb[0].mxu0 %v100
  %v272 = vpop.f32.mrb[0].mxu0
  %v273 = vadd.f32 %v55, %v272
  %v274 = vpop.f32.mrb[0].mxu0
  %275 = vmatprep.mubr.f32.mxu0 0.0
  %276 = vmatmul.mubr.f32.gmra.mrb[0].mxu0 %v103
  %v277 = vpop.f32.mrb[0].mxu0
  %v278 = vadd.f32 %v55, %v277
  %v279 = vpop.f32.mrb[0].mxu0
  %280 = vmatprep.mubr.f32.mxu0 0.0
  %281 = vmatmul.mubr.f32.gmra.mrb[0].mxu0 %v106
  %v282 = vpop.f32.mrb[0].mxu0
  %v283 = vadd.f32 %v55, %v282
  %v284 = vpop.f32.mrb[0].mxu0
  %285 = vmatprep.mubr.f32.mxu0 0.0
  %286 = vmatmul.mubr.f32.gmra.mrb[0].mxu0 %v109
  %v287 = vpop.f32.mrb[0].mxu0
  %v288 = vadd.f32 %v55, %v287
  %v289 = vpop.f32.mrb[0].mxu0
  %290 = vmatprep.mubr.f32.mxu0 0.0
  %291 = vmatmul.mubr.f32.gmra.mrb[0].mxu0 %v112
  %v292 = vpop.f32.mrb[0].mxu0
  %v293 = vadd.f32 %v55, %v292
  %v294 = vpop.f32.mrb[0].mxu0
  %295 = vmatprep.mubr.f32.mxu0 0.0
  %296 = vmatmul.mubr.f32.gmra.mrb[0].mxu0 %v115
  %v297 = vpop.f32.mrb[0].mxu0
  %v298 = vadd.f32 %v55, %v297
  %v299 = vpop.f32.mrb[0].mxu0
  %300 = vmatprep.mubr.f32.mxu0 0.0
  %301 = vmatmul.mubr.f32.gmra.mrb[0].mxu0 %v118
  %v302 = vpop.f32.mrb[0].mxu0
  %v303 = vadd.f32 %v55, %v302
  %v304 = vpop.f32.mrb[0].mxu0
  %305 = vmatprep.mubr.f32.mxu0 0.0
  %306 = vmatmul.mubr.f32.gmra.mrb[0].mxu0 %v121
  %v307 = vpop.f32.mrb[0].mxu0
  %v308 = vadd.f32 %v55, %v307
  %v309 = vpop.f32.mrb[0].mxu0
  %310 = vmatprep.mubr.f32.mxu0 0.0
  %311 = vmatmul.mubr.f32.gmra.mrb[0].mxu0 %v124
  %v312 = vpop.f32.mrb[0].mxu0
  %v313 = vadd.f32 %v55, %v312
  %v314 = vpop.f32.mrb[0].mxu0
  %315 = vmatprep.mubr.f32.mxu0 0.0
  %316 = vmatmul.mubr.f32.gmra.mrb[0].mxu0 %v127
  %v317 = vpop.f32.mrb[0].mxu0
  %v318 = vadd.f32 %v55, %v317
  %v319 = vpop.f32.mrb[0].mxu0
  %320 = vmatprep.mubr.f32.mxu0 0.0
  %321 = vmatmul.mubr.f32.gmra.mrb[0].mxu0 %v130
  %v322 = vpop.f32.mrb[0].mxu0
  %v323 = vadd.f32 %v55, %v322
  %v324 = vpop.f32.mrb[0].mxu0
  %325 = vdwg.mxu0
  %vm326 = vcmp.ge.f32.partialorder %v203, 0.0
  %vm327 = vcmp.ge.f32.partialorder %v208, 0.0
  %vm328 = vcmp.ge.f32.partialorder %v213, 0.0
  %vm329 = vcmp.ge.f32.partialorder %v218, 0.0
  %vm330 = vcmp.ge.f32.partialorder %v223, 0.0
  %vm331 = vcmp.ge.f32.partialorder %v228, 0.0
  %vm332 = vcmp.ge.f32.partialorder %v233, 0.0
  %vm333 = vcmp.ge.f32.partialorder %v238, 0.0
  %vm334 = vcmp.ge.f32.partialorder %v243, 0.0
  %vm335 = vcmp.ge.f32.partialorder %v248, 0.0
  %vm336 = vcmp.ge.f32.partialorder %v253, 0.0
  %vm337 = vcmp.ge.f32.partialorder %v258, 0.0
  %vm338 = vcmp.ge.f32.partialorder %v263, 0.0
  %vm339 = vcmp.ge.f32.partialorder %v268, 0.0
  %vm340 = vcmp.ge.f32.partialorder %v273, 0.0
  %vm341 = vcmp.ge.f32.partialorder %v278, 0.0
  %vm342 = vcmp.ge.f32.partialorder %v283, 0.0
  %vm343 = vcmp.ge.f32.partialorder %v288, 0.0
  %vm344 = vcmp.ge.f32.partialorder %v293, 0.0
  %vm345 = vcmp.ge.f32.partialorder %v298, 0.0
  %vm346 = vcmp.ge.f32.partialorder %v303, 0.0
  %vm347 = vcmp.ge.f32.partialorder %v308, 0.0
  %vm348 = vcmp.ge.f32.partialorder %v313, 0.0
  %vm349 = vcmp.ge.f32.partialorder %v318, 0.0
  %vm350 = vcmp.ge.f32.partialorder %v323, 0.0
  %v351 = vmul.f32 %v203, 0.01
  %v352 = vmul.f32 %v208, 0.01
  %v353 = vmul.f32 %v213, 0.01
  %v354 = vmul.f32 %v218, 0.01
  %v355 = vmul.f32 %v223, 0.01
  %v356 = vmul.f32 %v228, 0.01
  %v357 = vmul.f32 %v233, 0.01
  %v358 = vmul.f32 %v238, 0.01
  %v359 = vmul.f32 %v243, 0.01
  %v360 = vmul.f32 %v248, 0.01
  %v361 = vmul.f32 %v253, 0.01
  %v362 = vmul.f32 %v258, 0.01
  %v363 = vmul.f32 %v263, 0.01
  %v364 = vmul.f32 %v268, 0.01
  %v365 = vmul.f32 %v273, 0.01
  %v366 = vmul.f32 %v278, 0.01
  %v367 = vmul.f32 %v283, 0.01
  %v368 = vmul.f32 %v288, 0.01
  %v369 = vmul.f32 %v293, 0.01
  %v370 = vmul.f32 %v298, 0.01
  %v371 = vmul.f32 %v303, 0.01
  %v372 = vmul.f32 %v308, 0.01
  %v373 = vmul.f32 %v313, 0.01
  %v374 = vmul.f32 %v318, 0.01
  %v375 = vmul.f32 %v323, 0.01
  %v376 = vsel %vm326, %v203, %v351
  %v377 = vsel %vm327, %v208, %v352
  %v378 = vsel %vm328, %v213, %v353
  %v379 = vsel %vm329, %v218, %v354
  %v380 = vsel %vm330, %v223, %v355
  %v381 = vsel %vm331, %v228, %v356
  %v382 = vsel %vm332, %v233, %v357
  %v383 = vsel %vm333, %v238, %v358
  %v384 = vsel %vm334, %v243, %v359
  %v385 = vsel %vm335, %v248, %v360
  %v386 = vsel %vm336, %v253, %v361
  %v387 = vsel %vm337, %v258, %v362
  %v388 = vsel %vm338, %v263, %v363
  %v389 = vsel %vm339, %v268, %v364
  %v390 = vsel %vm340, %v273, %v365
  %v391 = vsel %vm341, %v278, %v366
  %v392 = vsel %vm342, %v283, %v367
  %v393 = vsel %vm343, %v288, %v368
  %v394 = vsel %vm344, %v293, %v369
  %v395 = vsel %vm345, %v298, %v370
  %v396 = vsel %vm346, %v303, %v371
  %v397 = vsel %vm347, %v308, %v372
  %v398 = vsel %vm348, %v313, %v373
  %v399 = vsel %vm349, %v318, %v374
  %v400 = vsel %vm350, %v323, %v375
  %v401 = vld [vmem:[%s2 + $0x60] sm:$0xff]
  %v402 = vld [vmem:[%s2 + $0x68] sm:$0xff]
  %v403 = vld [vmem:[%s2 + $0x70] sm:$0xff]
  %v404 = vld [vmem:[%s2 + $0x78] sm:$0xff]
  %v405 = vld [vmem:[%s2 + $0x80] sm:$0x1]
  %v406 = vlaneseq
  %v407 = vshrl.u32 %v406, 7
  %v408 = vsub.s32 0, %v407
  %v409 = vrot.slane %v405, %v408
  %vm410 = vcmask 261120
  %v412 = vsel %vm410, %v376, 0
  %v415 = vsel %vm410, %v377, 0
  %v418 = vsel %vm410, %v378, 0
  %v421 = vsel %vm410, %v379, 0
  %v424 = vsel %vm410, %v380, 0
  %v427 = vsel %vm410, %v381, 0
  %v430 = vsel %vm410, %v382, 0
  %v433 = vsel %vm410, %v383, 0
  %v436 = vsel %vm410, %v384, 0
  %v439 = vsel %vm410, %v385, 0
  %v442 = vsel %vm410, %v386, 0
  %v445 = vsel %vm410, %v387, 0
  %v448 = vsel %vm410, %v388, 0
  %v451 = vsel %vm410, %v389, 0
  %v454 = vsel %vm410, %v390, 0
  %v457 = vsel %vm410, %v391, 0
  %v460 = vsel %vm410, %v392, 0
  %v463 = vsel %vm410, %v393, 0
  %v466 = vsel %vm410, %v394, 0
  %v469 = vsel %vm410, %v395, 0
  %v472 = vsel %vm410, %v396, 0
  %v475 = vsel %vm410, %v397, 0
  %v478 = vsel %vm410, %v398, 0
  %v481 = vsel %vm410, %v399, 0
  %v484 = vsel %vm410, %v400, 0
  %486 = vmatprep.subr.mxu0 0.0
  %487 = vmatpush1.msra.mxu0 %v401
  %488 = vmatprep.subr.mxu0 0.0
  %489 = vmatpush1.msra.mxu0 %v402
  %490 = vmatprep.subr.mxu0 0.0
  %491 = vmatpush1.msra.mxu0 %v403
  %492 = vmatprep.subr.mxu0 0.0
  %493 = vmatpush1.msra.mxu0 %v404
  %494 = vmatprep.subr.mxu0 0.0
  %495 = vmatpush1.msra.mxu0 0.0
  %496 = vmatprep.subr.mxu0 0.0
  %497 = vmatpush1.msra.mxu0 0.0
  %498 = vmatprep.subr.mxu0 0.0
  %499 = vmatpush1.msra.mxu0 0.0
  %500 = vmatprep.subr.mxu0 0.0
  %501 = vmatpush1.msra.mxu0 0.0
  %502 = vmatprep.subr.mxu0 0.0
  %503 = vmatpush1.msra.mxu0 0.0
  %504 = vmatprep.subr.mxu0 0.0
  %505 = vmatpush1.msra.mxu0 0.0
  %506 = vmatprep.subr.mxu0 0.0
  %507 = vmatpush1.msra.mxu0 0.0
  %508 = vmatprep.subr.mxu0 0.0
  %509 = vmatpush1.msra.mxu0 0.0
  %510 = vmatprep.subr.mxu0 0.0
  %511 = vmatpush1.msra.mxu0 0.0
  %512 = vmatprep.subr.mxu0 0.0
  %513 = vmatpush1.msra.mxu0 0.0
  %514 = vmatprep.subr.mxu0 0.0
  %515 = vmatpush1.msra.mxu0 0.0
  %516 = vmatprep.subr.mxu0 0.0
  %517 = vmatpush1.msra.mxu0 0.0
  %518 = vmatprep.subr.mxu0 0.0
  %519 = vmatpush1.msra.mxu0 0.0
  %520 = vmatprep.subr.mxu0 0.0
  %521 = vmatpush1.msra.mxu0 0.0
  %522 = vmatprep.subr.mxu0 0.0
  %523 = vmatpush1.msra.mxu0 0.0
  %524 = vmatprep.subr.mxu0 0.0
  %525 = vmatpush1.msra.mxu0 0.0
  %526 = vmatprep.subr.mxu0 0.0
  %527 = vmatpush1.msra.mxu0 0.0
  %528 = vmatprep.subr.mxu0 0.0
  %529 = vmatpush1.msra.mxu0 0.0
  %530 = vmatprep.subr.mxu0 0.0
  %531 = vmatpush1.msra.mxu0 0.0
  %532 = vmatprep.subr.mxu0 0.0
  %533 = vmatpush1.msra.mxu0 0.0
  %534 = vmatprep.subr.mxu0 0.0
  %535 = vmatpush1.msra.mxu0 0.0
  %536 = vmatprep.subr.mxu0 0.0
  %537 = vmatpush1.msra.mxu0 0.0
  %538 = vmatprep.subr.mxu0 0.0
  %539 = vmatpush1.msra.mxu0 0.0
  %540 = vmatprep.subr.mxu0 0.0
  %541 = vmatpush1.msra.mxu0 0.0
  %542 = vmatprep.subr.mxu0 0.0
  %543 = vmatpush1.msra.mxu0 0.0
  %544 = vmatprep.subr.mxu0 0.0
  %545 = vmatpush1.msra.mxu0 0.0
  %546 = vmatprep.subr.mxu0 0.0
  %547 = vmatpush1.msra.mxu0 0.0
  %548 = vmatprep.subr.mxu0 0.0
  %549 = vmatpush1.msra.mxu0 0.0
  %550 = vmatprep.mubr.f32.mxu0 0.0
  %551 = vmatmul.mubr.f32.gmra.mrb[0].mxu0 %v412
  %v552 = vpop.f32.mrb[0].mxu0
  %v553 = vadd.f32 %v409, %v552
  %v554 = vpop.f32.mrb[0].mxu0
  %555 = vmatprep.mubr.f32.mxu0 0.0
  %556 = vmatmul.mubr.f32.gmra.mrb[0].mxu0 %v415
  %v557 = vpop.f32.mrb[0].mxu0
  %v558 = vadd.f32 %v409, %v557
  %v559 = vpop.f32.mrb[0].mxu0
  %560 = vmatprep.mubr.f32.mxu0 0.0
  %561 = vmatmul.mubr.f32.gmra.mrb[0].mxu0 %v418
  %v562 = vpop.f32.mrb[0].mxu0
  %v563 = vadd.f32 %v409, %v562
  %v564 = vpop.f32.mrb[0].mxu0
  %565 = vmatprep.mubr.f32.mxu0 0.0
  %566 = vmatmul.mubr.f32.gmra.mrb[0].mxu0 %v421
  %v567 = vpop.f32.mrb[0].mxu0
  %v568 = vadd.f32 %v409, %v567
  %v569 = vpop.f32.mrb[0].mxu0
  %570 = vmatprep.mubr.f32.mxu0 0.0
  %571 = vmatmul.mubr.f32.gmra.mrb[0].mxu0 %v424
  %v572 = vpop.f32.mrb[0].mxu0
  %v573 = vadd.f32 %v409, %v572
  %v574 = vpop.f32.mrb[0].mxu0
  %575 = vmatprep.mubr.f32.mxu0 0.0
  %576 = vmatmul.mubr.f32.gmra.mrb[0].mxu0 %v427
  %v577 = vpop.f32.mrb[0].mxu0
  %v578 = vadd.f32 %v409, %v577
  %v579 = vpop.f32.mrb[0].mxu0
  %580 = vmatprep.mubr.f32.mxu0 0.0
  %581 = vmatmul.mubr.f32.gmra.mrb[0].mxu0 %v430
  %v582 = vpop.f32.mrb[0].mxu0
  %v583 = vadd.f32 %v409, %v582
  %v584 = vpop.f32.mrb[0].mxu0
  %585 = vmatprep.mubr.f32.mxu0 0.0
  %586 = vmatmul.mubr.f32.gmra.mrb[0].mxu0 %v433
  %v587 = vpop.f32.mrb[0].mxu0
  %v588 = vadd.f32 %v409, %v587
  %v589 = vpop.f32.mrb[0].mxu0
  %590 = vmatprep.mubr.f32.mxu0 0.0
  %591 = vmatmul.mubr.f32.gmra.mrb[0].mxu0 %v436
  %v592 = vpop.f32.mrb[0].mxu0
  %v593 = vadd.f32 %v409, %v592
  %v594 = vpop.f32.mrb[0].mxu0
  %595 = vmatprep.mubr.f32.mxu0 0.0
  %596 = vmatmul.mubr.f32.gmra.mrb[0].mxu0 %v439
  %v597 = vpop.f32.mrb[0].mxu0
  %v598 = vadd.f32 %v409, %v597
  %v599 = vpop.f32.mrb[0].mxu0
  %600 = vmatprep.mubr.f32.mxu0 0.0
  %601 = vmatmul.mubr.f32.gmra.mrb[0].mxu0 %v442
  %v602 = vpop.f32.mrb[0].mxu0
  %v603 = vadd.f32 %v409, %v602
  %v604 = vpop.f32.mrb[0].mxu0
  %605 = vmatprep.mubr.f32.mxu0 0.0
  %606 = vmatmul.mubr.f32.gmra.mrb[0].mxu0 %v445
  %v607 = vpop.f32.mrb[0].mxu0
  %v608 = vadd.f32 %v409, %v607
  %v609 = vpop.f32.mrb[0].mxu0
  %610 = vmatprep.mubr.f32.mxu0 0.0
  %611 = vmatmul.mubr.f32.gmra.mrb[0].mxu0 %v448
  %v612 = vpop.f32.mrb[0].mxu0
  %v613 = vadd.f32 %v409, %v612
  %v614 = vpop.f32.mrb[0].mxu0
  %615 = vmatprep.mubr.f32.mxu0 0.0
  %616 = vmatmul.mubr.f32.gmra.mrb[0].mxu0 %v451
  %v617 = vpop.f32.mrb[0].mxu0
  %v618 = vadd.f32 %v409, %v617
  %v619 = vpop.f32.mrb[0].mxu0
  %620 = vmatprep.mubr.f32.mxu0 0.0
  %621 = vmatmul.mubr.f32.gmra.mrb[0].mxu0 %v454
  %v622 = vpop.f32.mrb[0].mxu0
  %v623 = vadd.f32 %v409, %v622
  %v624 = vpop.f32.mrb[0].mxu0
  %625 = vmatprep.mubr.f32.mxu0 0.0
  %626 = vmatmul.mubr.f32.gmra.mrb[0].mxu0 %v457
  %v627 = vpop.f32.mrb[0].mxu0
  %v628 = vadd.f32 %v409, %v627
  %v629 = vpop.f32.mrb[0].mxu0
  %630 = vmatprep.mubr.f32.mxu0 0.0
  %631 = vmatmul.mubr.f32.gmra.mrb[0].mxu0 %v460
  %v632 = vpop.f32.mrb[0].mxu0
  %v633 = vadd.f32 %v409, %v632
  %v634 = vpop.f32.mrb[0].mxu0
  %635 = vmatprep.mubr.f32.mxu0 0.0
  %636 = vmatmul.mubr.f32.gmra.mrb[0].mxu0 %v463
  %v637 = vpop.f32.mrb[0].mxu0
  %v638 = vadd.f32 %v409, %v637
  %v639 = vpop.f32.mrb[0].mxu0
  %640 = vmatprep.mubr.f32.mxu0 0.0
  %641 = vmatmul.mubr.f32.gmra.mrb[0].mxu0 %v466
  %v642 = vpop.f32.mrb[0].mxu0
  %v643 = vadd.f32 %v409, %v642
  %v644 = vpop.f32.mrb[0].mxu0
  %645 = vmatprep.mubr.f32.mxu0 0.0
  %646 = vmatmul.mubr.f32.gmra.mrb[0].mxu0 %v469
  %v647 = vpop.f32.mrb[0].mxu0
  %v648 = vadd.f32 %v409, %v647
  %v649 = vpop.f32.mrb[0].mxu0
  %650 = vmatprep.mubr.f32.mxu0 0.0
  %651 = vmatmul.mubr.f32.gmra.mrb[0].mxu0 %v472
  %v652 = vpop.f32.mrb[0].mxu0
  %v653 = vadd.f32 %v409, %v652
  %v654 = vpop.f32.mrb[0].mxu0
  %655 = vmatprep.mubr.f32.mxu0 0.0
  %656 = vmatmul.mubr.f32.gmra.mrb[0].mxu0 %v475
  %v657 = vpop.f32.mrb[0].mxu0
  %v658 = vadd.f32 %v409, %v657
  %v659 = vpop.f32.mrb[0].mxu0
  %660 = vmatprep.mubr.f32.mxu0 0.0
  %661 = vmatmul.mubr.f32.gmra.mrb[0].mxu0 %v478
  %v662 = vpop.f32.mrb[0].mxu0
  %v663 = vadd.f32 %v409, %v662
  %v664 = vpop.f32.mrb[0].mxu0
  %665 = vmatprep.mubr.f32.mxu0 0.0
  %666 = vmatmul.mubr.f32.gmra.mrb[0].mxu0 %v481
  %v667 = vpop.f32.mrb[0].mxu0
  %v668 = vadd.f32 %v409, %v667
  %v669 = vpop.f32.mrb[0].mxu0
  %670 = vmatprep.mubr.f32.mxu0 0.0
  %671 = vmatmul.mubr.f32.gmra.mrb[0].mxu0 %v484
  %v672 = vpop.f32.mrb[0].mxu0
  %v673 = vadd.f32 %v409, %v672
  %v674 = vpop.f32.mrb[0].mxu0
  %675 = vdwg.mxu0
  %vm676 = vcmp.ge.f32.partialorder %v553, 0.0
  %vm677 = vcmp.ge.f32.partialorder %v558, 0.0
  %vm678 = vcmp.ge.f32.partialorder %v563, 0.0
  %vm679 = vcmp.ge.f32.partialorder %v568, 0.0
  %vm680 = vcmp.ge.f32.partialorder %v573, 0.0
  %vm681 = vcmp.ge.f32.partialorder %v578, 0.0
  %vm682 = vcmp.ge.f32.partialorder %v583, 0.0
  %vm683 = vcmp.ge.f32.partialorder %v588, 0.0
  %vm684 = vcmp.ge.f32.partialorder %v593, 0.0
  %vm685 = vcmp.ge.f32.partialorder %v598, 0.0
  %vm686 = vcmp.ge.f32.partialorder %v603, 0.0
  %vm687 = vcmp.ge.f32.partialorder %v608, 0.0
  %vm688 = vcmp.ge.f32.partialorder %v613, 0.0
  %vm689 = vcmp.ge.f32.partialorder %v618, 0.0
  %vm690 = vcmp.ge.f32.partialorder %v623, 0.0
  %vm691 = vcmp.ge.f32.partialorder %v628, 0.0
  %vm692 = vcmp.ge.f32.partialorder %v633, 0.0
  %vm693 = vcmp.ge.f32.partialorder %v638, 0.0
  %vm694 = vcmp.ge.f32.partialorder %v643, 0.0
  %vm695 = vcmp.ge.f32.partialorder %v648, 0.0
  %vm696 = vcmp.ge.f32.partialorder %v653, 0.0
  %vm697 = vcmp.ge.f32.partialorder %v658, 0.0
  %vm698 = vcmp.ge.f32.partialorder %v663, 0.0
  %vm699 = vcmp.ge.f32.partialorder %v668, 0.0
  %vm700 = vcmp.ge.f32.partialorder %v673, 0.0
  %v701 = vmul.f32 %v553, 0.01
  %v702 = vmul.f32 %v558, 0.01
  %v703 = vmul.f32 %v563, 0.01
  %v704 = vmul.f32 %v568, 0.01
  %v705 = vmul.f32 %v573, 0.01
  %v706 = vmul.f32 %v578, 0.01
  %v707 = vmul.f32 %v583, 0.01
  %v708 = vmul.f32 %v588, 0.01
  %v709 = vmul.f32 %v593, 0.01
  %v710 = vmul.f32 %v598, 0.01
  %v711 = vmul.f32 %v603, 0.01
  %v712 = vmul.f32 %v608, 0.01
  %v713 = vmul.f32 %v613, 0.01
  %v714 = vmul.f32 %v618, 0.01
  %v715 = vmul.f32 %v623, 0.01
  %v716 = vmul.f32 %v628, 0.01
  %v717 = vmul.f32 %v633, 0.01
  %v718 = vmul.f32 %v638, 0.01
  %v719 = vmul.f32 %v643, 0.01
  %v720 = vmul.f32 %v648, 0.01
  %v721 = vmul.f32 %v653, 0.01
  %v722 = vmul.f32 %v658, 0.01
  %v723 = vmul.f32 %v663, 0.01
  %v724 = vmul.f32 %v668, 0.01
  %v725 = vmul.f32 %v673, 0.01
  %v726 = vsel %vm676, %v553, %v701
  %v727 = vsel %vm677, %v558, %v702
  %v728 = vsel %vm678, %v563, %v703
  %v729 = vsel %vm679, %v568, %v704
  %v730 = vsel %vm680, %v573, %v705
  %v731 = vsel %vm681, %v578, %v706
  %v732 = vsel %vm682, %v583, %v707
  %v733 = vsel %vm683, %v588, %v708
  %v734 = vsel %vm684, %v593, %v709
  %v735 = vsel %vm685, %v598, %v710
  %v736 = vsel %vm686, %v603, %v711
  %v737 = vsel %vm687, %v608, %v712
  %v738 = vsel %vm688, %v613, %v713
  %v739 = vsel %vm689, %v618, %v714
  %v740 = vsel %vm690, %v623, %v715
  %v741 = vsel %vm691, %v628, %v716
  %v742 = vsel %vm692, %v633, %v717
  %v743 = vsel %vm693, %v638, %v718
  %v744 = vsel %vm694, %v643, %v719
  %v745 = vsel %vm695, %v648, %v720
  %v746 = vsel %vm696, %v653, %v721
  %v747 = vsel %vm697, %v658, %v722
  %v748 = vsel %vm698, %v663, %v723
  %v749 = vsel %vm699, %v668, %v724
  %v750 = vsel %vm700, %v673, %v725
  %v751 = vld [vmem:[%s2 + $0x88] sm:$0xff]
  %v752 = vld [vmem:[%s2 + $0x90] sm:$0xff]
  %v753 = vld [vmem:[%s2 + $0x98] sm:$0x1]
  %v754 = vlaneseq
  %v755 = vshrl.u32 %v754, 7
  %v756 = vsub.s32 0, %v755
  %v757 = vrot.slane %v753, %v756
  %vm758 = vcmask 130048
  %v760 = vsel %vm758, %v726, 0
  %v763 = vsel %vm758, %v727, 0
  %v766 = vsel %vm758, %v728, 0
  %v769 = vsel %vm758, %v729, 0
  %v772 = vsel %vm758, %v730, 0
  %v775 = vsel %vm758, %v731, 0
  %v778 = vsel %vm758, %v732, 0
  %v781 = vsel %vm758, %v733, 0
  %v784 = vsel %vm758, %v734, 0
  %v787 = vsel %vm758, %v735, 0
  %v790 = vsel %vm758, %v736, 0
  %v793 = vsel %vm758, %v737, 0
  %v796 = vsel %vm758, %v738, 0
  %v799 = vsel %vm758, %v739, 0
  %v802 = vsel %vm758, %v740, 0
  %v805 = vsel %vm758, %v741, 0
  %v808 = vsel %vm758, %v742, 0
  %v811 = vsel %vm758, %v743, 0
  %v814 = vsel %vm758, %v744, 0
  %v817 = vsel %vm758, %v745, 0
  %v820 = vsel %vm758, %v746, 0
  %v823 = vsel %vm758, %v747, 0
  %v826 = vsel %vm758, %v748, 0
  %v829 = vsel %vm758, %v749, 0
  %v832 = vsel %vm758, %v750, 0
  %834 = vmatprep.subr.mxu0 0.0
  %835 = vmatpush1.msra.mxu0 %v751
  %836 = vmatprep.subr.mxu0 0.0
  %837 = vmatpush1.msra.mxu0 %v752
  %838 = vmatprep.subr.mxu0 0.0
  %839 = vmatpush1.msra.mxu0 0.0
  %840 = vmatprep.subr.mxu0 0.0
  %841 = vmatpush1.msra.mxu0 0.0
  %842 = vmatprep.subr.mxu0 0.0
  %843 = vmatpush1.msra.mxu0 0.0
  %844 = vmatprep.subr.mxu0 0.0
  %845 = vmatpush1.msra.mxu0 0.0
  %846 = vmatprep.subr.mxu0 0.0
  %847 = vmatpush1.msra.mxu0 0.0
  %848 = vmatprep.subr.mxu0 0.0
  %849 = vmatpush1.msra.mxu0 0.0
  %850 = vmatprep.subr.mxu0 0.0
  %851 = vmatpush1.msra.mxu0 0.0
  %852 = vmatprep.subr.mxu0 0.0
  %853 = vmatpush1.msra.mxu0 0.0
  %854 = vmatprep.subr.mxu0 0.0
  %855 = vmatpush1.msra.mxu0 0.0
  %856 = vmatprep.subr.mxu0 0.0
  %857 = vmatpush1.msra.mxu0 0.0
  %858 = vmatprep.subr.mxu0 0.0
  %859 = vmatpush1.msra.mxu0 0.0
  %860 = vmatprep.subr.mxu0 0.0
  %861 = vmatpush1.msra.mxu0 0.0
  %862 = vmatprep.subr.mxu0 0.0
  %863 = vmatpush1.msra.mxu0 0.0
  %864 = vmatprep.subr.mxu0 0.0
  %865 = vmatpush1.msra.mxu0 0.0
  %866 = vmatprep.subr.mxu0 0.0
  %867 = vmatpush1.msra.mxu0 0.0
  %868 = vmatprep.subr.mxu0 0.0
  %869 = vmatpush1.msra.mxu0 0.0
  %870 = vmatprep.subr.mxu0 0.0
  %871 = vmatpush1.msra.mxu0 0.0
  %872 = vmatprep.subr.mxu0 0.0
  %873 = vmatpush1.msra.mxu0 0.0
  %874 = vmatprep.subr.mxu0 0.0
  %875 = vmatpush1.msra.mxu0 0.0
  %876 = vmatprep.subr.mxu0 0.0
  %877 = vmatpush1.msra.mxu0 0.0
  %878 = vmatprep.subr.mxu0 0.0
  %879 = vmatpush1.msra.mxu0 0.0
  %880 = vmatprep.subr.mxu0 0.0
  %881 = vmatpush1.msra.mxu0 0.0
  %882 = vmatprep.subr.mxu0 0.0
  %883 = vmatpush1.msra.mxu0 0.0
  %884 = vmatprep.subr.mxu0 0.0
  %885 = vmatpush1.msra.mxu0 0.0
  %886 = vmatprep.subr.mxu0 0.0
  %887 = vmatpush1.msra.mxu0 0.0
  %888 = vmatprep.subr.mxu0 0.0
  %889 = vmatpush1.msra.mxu0 0.0
  %890 = vmatprep.subr.mxu0 0.0
  %891 = vmatpush1.msra.mxu0 0.0
  %892 = vmatprep.subr.mxu0 0.0
  %893 = vmatpush1.msra.mxu0 0.0
  %894 = vmatprep.subr.mxu0 0.0
  %895 = vmatpush1.msra.mxu0 0.0
  %896 = vmatprep.subr.mxu0 0.0
  %897 = vmatpush1.msra.mxu0 0.0
  %898 = vmatprep.mubr.f32.mxu0 0.0
  %899 = vmatmul.mubr.f32.gmra.mrb[0].mxu0 %v760
  %v900 = vpop.f32.mrb[0].mxu0
  %v901 = vadd.f32 %v757, %v900
  %v902 = vpop.f32.mrb[0].mxu0
  %903 = vmatprep.mubr.f32.mxu0 0.0
  %904 = vmatmul.mubr.f32.gmra.mrb[0].mxu0 %v763
  %v905 = vpop.f32.mrb[0].mxu0
  %v906 = vadd.f32 %v757, %v905
  %v907 = vpop.f32.mrb[0].mxu0
  %908 = vmatprep.mubr.f32.mxu0 0.0
  %909 = vmatmul.mubr.f32.gmra.mrb[0].mxu0 %v766
  %v910 = vpop.f32.mrb[0].mxu0
  %v911 = vadd.f32 %v757, %v910
  %v912 = vpop.f32.mrb[0].mxu0
  %913 = vmatprep.mubr.f32.mxu0 0.0
  %914 = vmatmul.mubr.f32.gmra.mrb[0].mxu0 %v769
  %v915 = vpop.f32.mrb[0].mxu0
  %v916 = vadd.f32 %v757, %v915
  %v917 = vpop.f32.mrb[0].mxu0
  %918 = vmatprep.mubr.f32.mxu0 0.0
  %919 = vmatmul.mubr.f32.gmra.mrb[0].mxu0 %v772
  %v920 = vpop.f32.mrb[0].mxu0
  %v921 = vadd.f32 %v757, %v920
  %v922 = vpop.f32.mrb[0].mxu0
  %923 = vmatprep.mubr.f32.mxu0 0.0
  %924 = vmatmul.mubr.f32.gmra.mrb[0].mxu0 %v775
  %v925 = vpop.f32.mrb[0].mxu0
  %v926 = vadd.f32 %v757, %v925
  %v927 = vpop.f32.mrb[0].mxu0
  %928 = vmatprep.mubr.f32.mxu0 0.0
  %929 = vmatmul.mubr.f32.gmra.mrb[0].mxu0 %v778
  %v930 = vpop.f32.mrb[0].mxu0
  %v931 = vadd.f32 %v757, %v930
  %v932 = vpop.f32.mrb[0].mxu0
  %933 = vmatprep.mubr.f32.mxu0 0.0
  %934 = vmatmul.mubr.f32.gmra.mrb[0].mxu0 %v781
  %v935 = vpop.f32.mrb[0].mxu0
  %v936 = vadd.f32 %v757, %v935
  %v937 = vpop.f32.mrb[0].mxu0
  %938 = vmatprep.mubr.f32.mxu0 0.0
  %939 = vmatmul.mubr.f32.gmra.mrb[0].mxu0 %v784
  %v940 = vpop.f32.mrb[0].mxu0
  %v941 = vadd.f32 %v757, %v940
  %v942 = vpop.f32.mrb[0].mxu0
  %943 = vmatprep.mubr.f32.mxu0 0.0
  %944 = vmatmul.mubr.f32.gmra.mrb[0].mxu0 %v787
  %v945 = vpop.f32.mrb[0].mxu0
  %v946 = vadd.f32 %v757, %v945
  %v947 = vpop.f32.mrb[0].mxu0
  %948 = vmatprep.mubr.f32.mxu0 0.0
  %949 = vmatmul.mubr.f32.gmra.mrb[0].mxu0 %v790
  %v950 = vpop.f32.mrb[0].mxu0
  %v951 = vadd.f32 %v757, %v950
  %v952 = vpop.f32.mrb[0].mxu0
  %953 = vmatprep.mubr.f32.mxu0 0.0
  %954 = vmatmul.mubr.f32.gmra.mrb[0].mxu0 %v793
  %v955 = vpop.f32.mrb[0].mxu0
  %v956 = vadd.f32 %v757, %v955
  %v957 = vpop.f32.mrb[0].mxu0
  %958 = vmatprep.mubr.f32.mxu0 0.0
  %959 = vmatmul.mubr.f32.gmra.mrb[0].mxu0 %v796
  %v960 = vpop.f32.mrb[0].mxu0
  %v961 = vadd.f32 %v757, %v960
  %v962 = vpop.f32.mrb[0].mxu0
  %963 = vmatprep.mubr.f32.mxu0 0.0
  %964 = vmatmul.mubr.f32.gmra.mrb[0].mxu0 %v799
  %v965 = vpop.f32.mrb[0].mxu0
  %v966 = vadd.f32 %v757, %v965
  %v967 = vpop.f32.mrb[0].mxu0
  %968 = vmatprep.mubr.f32.mxu0 0.0
  %969 = vmatmul.mubr.f32.gmra.mrb[0].mxu0 %v802
  %v970 = vpop.f32.mrb[0].mxu0
  %v971 = vadd.f32 %v757, %v970
  %v972 = vpop.f32.mrb[0].mxu0
  %973 = vmatprep.mubr.f32.mxu0 0.0
  %974 = vmatmul.mubr.f32.gmra.mrb[0].mxu0 %v805
  %v975 = vpop.f32.mrb[0].mxu0
  %v976 = vadd.f32 %v757, %v975
  %v977 = vpop.f32.mrb[0].mxu0
  %978 = vmatprep.mubr.f32.mxu0 0.0
  %979 = vmatmul.mubr.f32.gmra.mrb[0].mxu0 %v808
  %v980 = vpop.f32.mrb[0].mxu0
  %v981 = vadd.f32 %v757, %v980
  %v982 = vpop.f32.mrb[0].mxu0
  %983 = vmatprep.mubr.f32.mxu0 0.0
  %984 = vmatmul.mubr.f32.gmra.mrb[0].mxu0 %v811
  %v985 = vpop.f32.mrb[0].mxu0
  %v986 = vadd.f32 %v757, %v985
  %v987 = vpop.f32.mrb[0].mxu0
  %988 = vmatprep.mubr.f32.mxu0 0.0
  %989 = vmatmul.mubr.f32.gmra.mrb[0].mxu0 %v814
  %v990 = vpop.f32.mrb[0].mxu0
  %v991 = vadd.f32 %v757, %v990
  %v992 = vpop.f32.mrb[0].mxu0
  %993 = vmatprep.mubr.f32.mxu0 0.0
  %994 = vmatmul.mubr.f32.gmra.mrb[0].mxu0 %v817
  %v995 = vpop.f32.mrb[0].mxu0
  %v996 = vadd.f32 %v757, %v995
  %v997 = vpop.f32.mrb[0].mxu0
  %998 = vmatprep.mubr.f32.mxu0 0.0
  %999 = vmatmul.mubr.f32.gmra.mrb[0].mxu0 %v820
  %v1000 = vpop.f32.mrb[0].mxu0
  %v1001 = vadd.f32 %v757, %v1000
  %v1002 = vpop.f32.mrb[0].mxu0
  %1003 = vmatprep.mubr.f32.mxu0 0.0
  %1004 = vmatmul.mubr.f32.gmra.mrb[0].mxu0 %v823
  %v1005 = vpop.f32.mrb[0].mxu0
  %v1006 = vadd.f32 %v757, %v1005
  %v1007 = vpop.f32.mrb[0].mxu0
  %1008 = vmatprep.mubr.f32.mxu0 0.0
  %1009 = vmatmul.mubr.f32.gmra.mrb[0].mxu0 %v826
  %v1010 = vpop.f32.mrb[0].mxu0
  %v1011 = vadd.f32 %v757, %v1010
  %v1012 = vpop.f32.mrb[0].mxu0
  %1013 = vmatprep.mubr.f32.mxu0 0.0
  %1014 = vmatmul.mubr.f32.gmra.mrb[0].mxu0 %v829
  %v1015 = vpop.f32.mrb[0].mxu0
  %v1016 = vadd.f32 %v757, %v1015
  %v1017 = vpop.f32.mrb[0].mxu0
  %1018 = vmatprep.mubr.f32.mxu0 0.0
  %1019 = vmatmul.mubr.f32.gmra.mrb[0].mxu0 %v832
  %v1020 = vpop.f32.mrb[0].mxu0
  %v1021 = vadd.f32 %v757, %v1020
  %v1022 = vpop.f32.mrb[0].mxu0
  %1023 = vdwg.mxu0
  %vm1024 = vcmp.ge.f32.partialorder %v901, 0.0
  %vm1025 = vcmp.ge.f32.partialorder %v906, 0.0
  %vm1026 = vcmp.ge.f32.partialorder %v911, 0.0
  %vm1027 = vcmp.ge.f32.partialorder %v916, 0.0
  %vm1028 = vcmp.ge.f32.partialorder %v921, 0.0
  %vm1029 = vcmp.ge.f32.partialorder %v926, 0.0
  %vm1030 = vcmp.ge.f32.partialorder %v931, 0.0
  %vm1031 = vcmp.ge.f32.partialorder %v936, 0.0
  %vm1032 = vcmp.ge.f32.partialorder %v941, 0.0
  %vm1033 = vcmp.ge.f32.partialorder %v946, 0.0
  %vm1034 = vcmp.ge.f32.partialorder %v951, 0.0
  %vm1035 = vcmp.ge.f32.partialorder %v956, 0.0
  %vm1036 = vcmp.ge.f32.partialorder %v961, 0.0
  %vm1037 = vcmp.ge.f32.partialorder %v966, 0.0
  %vm1038 = vcmp.ge.f32.partialorder %v971, 0.0
  %vm1039 = vcmp.ge.f32.partialorder %v976, 0.0
  %vm1040 = vcmp.ge.f32.partialorder %v981, 0.0
  %vm1041 = vcmp.ge.f32.partialorder %v986, 0.0
  %vm1042 = vcmp.ge.f32.partialorder %v991, 0.0
  %vm1043 = vcmp.ge.f32.partialorder %v996, 0.0
  %vm1044 = vcmp.ge.f32.partialorder %v1001, 0.0
  %vm1045 = vcmp.ge.f32.partialorder %v1006, 0.0
  %vm1046 = vcmp.ge.f32.partialorder %v1011, 0.0
  %vm1047 = vcmp.ge.f32.partialorder %v1016, 0.0
  %vm1048 = vcmp.ge.f32.partialorder %v1021, 0.0
  %v1049 = vmul.f32 %v901, 0.01
  %v1050 = vmul.f32 %v906, 0.01
  %v1051 = vmul.f32 %v911, 0.01
  %v1052 = vmul.f32 %v916, 0.01
  %v1053 = vmul.f32 %v921, 0.01
  %v1054 = vmul.f32 %v926, 0.01
  %v1055 = vmul.f32 %v931, 0.01
  %v1056 = vmul.f32 %v936, 0.01
  %v1057 = vmul.f32 %v941, 0.01
  %v1058 = vmul.f32 %v946, 0.01
  %v1059 = vmul.f32 %v951, 0.01
  %v1060 = vmul.f32 %v956, 0.01
  %v1061 = vmul.f32 %v961, 0.01
  %v1062 = vmul.f32 %v966, 0.01
  %v1063 = vmul.f32 %v971, 0.01
  %v1064 = vmul.f32 %v976, 0.01
  %v1065 = vmul.f32 %v981, 0.01
  %v1066 = vmul.f32 %v986, 0.01
  %v1067 = vmul.f32 %v991, 0.01
  %v1068 = vmul.f32 %v996, 0.01
  %v1069 = vmul.f32 %v1001, 0.01
  %v1070 = vmul.f32 %v1006, 0.01
  %v1071 = vmul.f32 %v1011, 0.01
  %v1072 = vmul.f32 %v1016, 0.01
  %v1073 = vmul.f32 %v1021, 0.01
  %v1074 = vsel %vm1024, %v901, %v1049
  %v1075 = vsel %vm1025, %v906, %v1050
  %v1076 = vsel %vm1026, %v911, %v1051
  %v1077 = vsel %vm1027, %v916, %v1052
  %v1078 = vsel %vm1028, %v921, %v1053
  %v1079 = vsel %vm1029, %v926, %v1054
  %v1080 = vsel %vm1030, %v931, %v1055
  %v1081 = vsel %vm1031, %v936, %v1056
  %v1082 = vsel %vm1032, %v941, %v1057
  %v1083 = vsel %vm1033, %v946, %v1058
  %v1084 = vsel %vm1034, %v951, %v1059
  %v1085 = vsel %vm1035, %v956, %v1060
  %v1086 = vsel %vm1036, %v961, %v1061
  %v1087 = vsel %vm1037, %v966, %v1062
  %v1088 = vsel %vm1038, %v971, %v1063
  %v1089 = vsel %vm1039, %v976, %v1064
  %v1090 = vsel %vm1040, %v981, %v1065
  %v1091 = vsel %vm1041, %v986, %v1066
  %v1092 = vsel %vm1042, %v991, %v1067
  %v1093 = vsel %vm1043, %v996, %v1068
  %v1094 = vsel %vm1044, %v1001, %v1069
  %v1095 = vsel %vm1045, %v1006, %v1070
  %v1096 = vsel %vm1046, %v1011, %v1071
  %v1097 = vsel %vm1047, %v1016, %v1072
  %v1098 = vsel %vm1048, %v1021, %v1073
  %v1099 = vld [vmem:[%s2 + $0xa0] sm:$0xff]
  %v1100 = vld [vmem:[%s2 + $0xa8] sm:$0x1]
  %v1101 = vlaneseq
  %v1102 = vshrl.u32 %v1101, 7
  %v1103 = vsub.s32 0, %v1102
  %v1104 = vrot.slane %v1100, %v1103
  %vm1105 = vcmask 64512
  %v1107 = vsel %vm1105, %v1074, 0
  %v1110 = vsel %vm1105, %v1075, 0
  %v1113 = vsel %vm1105, %v1076, 0
  %v1116 = vsel %vm1105, %v1077, 0
  %v1119 = vsel %vm1105, %v1078, 0
  %v1122 = vsel %vm1105, %v1079, 0
  %v1125 = vsel %vm1105, %v1080, 0
  %v1128 = vsel %vm1105, %v1081, 0
  %v1131 = vsel %vm1105, %v1082, 0
  %v1134 = vsel %vm1105, %v1083, 0
  %v1137 = vsel %vm1105, %v1084, 0
  %v1140 = vsel %vm1105, %v1085, 0
  %v1143 = vsel %vm1105, %v1086, 0
  %v1146 = vsel %vm1105, %v1087, 0
  %v1149 = vsel %vm1105, %v1088, 0
  %v1152 = vsel %vm1105, %v1089, 0
  %v1155 = vsel %vm1105, %v1090, 0
  %v1158 = vsel %vm1105, %v1091, 0
  %v1161 = vsel %vm1105, %v1092, 0
  %v1164 = vsel %vm1105, %v1093, 0
  %v1167 = vsel %vm1105, %v1094, 0
  %v1170 = vsel %vm1105, %v1095, 0
  %v1173 = vsel %vm1105, %v1096, 0
  %v1176 = vsel %vm1105, %v1097, 0
  %v1179 = vsel %vm1105, %v1098, 0
  %1181 = vmatprep.subr.mxu0 0.0
  %1182 = vmatpush1.msra.mxu0 %v1099
  %1183 = vmatprep.subr.mxu0 0.0
  %1184 = vmatpush1.msra.mxu0 0.0
  %1185 = vmatprep.subr.mxu0 0.0
  %1186 = vmatpush1.msra.mxu0 0.0
  %1187 = vmatprep.subr.mxu0 0.0
  %1188 = vmatpush1.msra.mxu0 0.0
  %1189 = vmatprep.subr.mxu0 0.0
  %1190 = vmatpush1.msra.mxu0 0.0
  %1191 = vmatprep.subr.mxu0 0.0
  %1192 = vmatpush1.msra.mxu0 0.0
  %1193 = vmatprep.subr.mxu0 0.0
  %1194 = vmatpush1.msra.mxu0 0.0
  %1195 = vmatprep.subr.mxu0 0.0
  %1196 = vmatpush1.msra.mxu0 0.0
  %1197 = vmatprep.subr.mxu0 0.0
  %1198 = vmatpush1.msra.mxu0 0.0
  %1199 = vmatprep.subr.mxu0 0.0
  %1200 = vmatpush1.msra.mxu0 0.0
  %1201 = vmatprep.subr.mxu0 0.0
  %1202 = vmatpush1.msra.mxu0 0.0
  %1203 = vmatprep.subr.mxu0 0.0
  %1204 = vmatpush1.msra.mxu0 0.0
  %1205 = vmatprep.subr.mxu0 0.0
  %1206 = vmatpush1.msra.mxu0 0.0
  %1207 = vmatprep.subr.mxu0 0.0
  %1208 = vmatpush1.msra.mxu0 0.0
  %1209 = vmatprep.subr.mxu0 0.0
  %1210 = vmatpush1.msra.mxu0 0.0
  %1211 = vmatprep.subr.mxu0 0.0
  %1212 = vmatpush1.msra.mxu0 0.0
  %1213 = vmatprep.subr.mxu0 0.0
  %1214 = vmatpush1.msra.mxu0 0.0
  %1215 = vmatprep.subr.mxu0 0.0
  %1216 = vmatpush1.msra.mxu0 0.0
  %1217 = vmatprep.subr.mxu0 0.0
  %1218 = vmatpush1.msra.mxu0 0.0
  %1219 = vmatprep.subr.mxu0 0.0
  %1220 = vmatpush1.msra.mxu0 0.0
  %1221 = vmatprep.subr.mxu0 0.0
  %1222 = vmatpush1.msra.mxu0 0.0
  %1223 = vmatprep.subr.mxu0 0.0
  %1224 = vmatpush1.msra.mxu0 0.0
  %1225 = vmatprep.subr.mxu0 0.0
  %1226 = vmatpush1.msra.mxu0 0.0
  %1227 = vmatprep.subr.mxu0 0.0
  %1228 = vmatpush1.msra.mxu0 0.0
  %1229 = vmatprep.subr.mxu0 0.0
  %1230 = vmatpush1.msra.mxu0 0.0
  %1231 = vmatprep.subr.mxu0 0.0
  %1232 = vmatpush1.msra.mxu0 0.0
  %1233 = vmatprep.subr.mxu0 0.0
  %1234 = vmatpush1.msra.mxu0 0.0
  %1235 = vmatprep.subr.mxu0 0.0
  %1236 = vmatpush1.msra.mxu0 0.0
  %1237 = vmatprep.subr.mxu0 0.0
  %1238 = vmatpush1.msra.mxu0 0.0
  %1239 = vmatprep.subr.mxu0 0.0
  %1240 = vmatpush1.msra.mxu0 0.0
  %1241 = vmatprep.subr.mxu0 0.0
  %1242 = vmatpush1.msra.mxu0 0.0
  %1243 = vmatprep.subr.mxu0 0.0
  %1244 = vmatpush1.msra.mxu0 0.0
  %1245 = vmatprep.mubr.f32.mxu0 0.0
  %1246 = vmatmul.mubr.f32.gmra.mrb[0].mxu0 %v1107
  %v1247 = vpop.f32.mrb[0].mxu0
  %v1248 = vadd.f32 %v1104, %v1247
  %v1249 = vpop.f32.mrb[0].mxu0
  %1250 = vmatprep.mubr.f32.mxu0 0.0
  %1251 = vmatmul.mubr.f32.gmra.mrb[0].mxu0 %v1110
  %v1252 = vpop.f32.mrb[0].mxu0
  %v1253 = vadd.f32 %v1104, %v1252
  %v1254 = vpop.f32.mrb[0].mxu0
  %1255 = vmatprep.mubr.f32.mxu0 0.0
  %1256 = vmatmul.mubr.f32.gmra.mrb[0].mxu0 %v1113
  %v1257 = vpop.f32.mrb[0].mxu0
  %v1258 = vadd.f32 %v1104, %v1257
  %v1259 = vpop.f32.mrb[0].mxu0
  %1260 = vmatprep.mubr.f32.mxu0 0.0
  %1261 = vmatmul.mubr.f32.gmra.mrb[0].mxu0 %v1116
  %v1262 = vpop.f32.mrb[0].mxu0
  %v1263 = vadd.f32 %v1104, %v1262
  %v1264 = vpop.f32.mrb[0].mxu0
  %1265 = vmatprep.mubr.f32.mxu0 0.0
  %1266 = vmatmul.mubr.f32.gmra.mrb[0].mxu0 %v1119
  %v1267 = vpop.f32.mrb[0].mxu0
  %v1268 = vadd.f32 %v1104, %v1267
  %v1269 = vpop.f32.mrb[0].mxu0
  %1270 = vmatprep.mubr.f32.mxu0 0.0
  %1271 = vmatmul.mubr.f32.gmra.mrb[0].mxu0 %v1122
  %v1272 = vpop.f32.mrb[0].mxu0
  %v1273 = vadd.f32 %v1104, %v1272
  %v1274 = vpop.f32.mrb[0].mxu0
  %1275 = vmatprep.mubr.f32.mxu0 0.0
  %1276 = vmatmul.mubr.f32.gmra.mrb[0].mxu0 %v1125
  %v1277 = vpop.f32.mrb[0].mxu0
  %v1278 = vadd.f32 %v1104, %v1277
  %v1279 = vpop.f32.mrb[0].mxu0
  %1280 = vmatprep.mubr.f32.mxu0 0.0
  %1281 = vmatmul.mubr.f32.gmra.mrb[0].mxu0 %v1128
  %v1282 = vpop.f32.mrb[0].mxu0
  %v1283 = vadd.f32 %v1104, %v1282
  %v1284 = vpop.f32.mrb[0].mxu0
  %1285 = vmatprep.mubr.f32.mxu0 0.0
  %1286 = vmatmul.mubr.f32.gmra.mrb[0].mxu0 %v1131
  %v1287 = vpop.f32.mrb[0].mxu0
  %v1288 = vadd.f32 %v1104, %v1287
  %v1289 = vpop.f32.mrb[0].mxu0
  %1290 = vmatprep.mubr.f32.mxu0 0.0
  %1291 = vmatmul.mubr.f32.gmra.mrb[0].mxu0 %v1134
  %v1292 = vpop.f32.mrb[0].mxu0
  %v1293 = vadd.f32 %v1104, %v1292
  %v1294 = vpop.f32.mrb[0].mxu0
  %1295 = vmatprep.mubr.f32.mxu0 0.0
  %1296 = vmatmul.mubr.f32.gmra.mrb[0].mxu0 %v1137
  %v1297 = vpop.f32.mrb[0].mxu0
  %v1298 = vadd.f32 %v1104, %v1297
  %v1299 = vpop.f32.mrb[0].mxu0
  %1300 = vmatprep.mubr.f32.mxu0 0.0
  %1301 = vmatmul.mubr.f32.gmra.mrb[0].mxu0 %v1140
  %v1302 = vpop.f32.mrb[0].mxu0
  %v1303 = vadd.f32 %v1104, %v1302
  %v1304 = vpop.f32.mrb[0].mxu0
  %1305 = vmatprep.mubr.f32.mxu0 0.0
  %1306 = vmatmul.mubr.f32.gmra.mrb[0].mxu0 %v1143
  %v1307 = vpop.f32.mrb[0].mxu0
  %v1308 = vadd.f32 %v1104, %v1307
  %v1309 = vpop.f32.mrb[0].mxu0
  %1310 = vmatprep.mubr.f32.mxu0 0.0
  %1311 = vmatmul.mubr.f32.gmra.mrb[0].mxu0 %v1146
  %v1312 = vpop.f32.mrb[0].mxu0
  %v1313 = vadd.f32 %v1104, %v1312
  %v1314 = vpop.f32.mrb[0].mxu0
  %1315 = vmatprep.mubr.f32.mxu0 0.0
  %1316 = vmatmul.mubr.f32.gmra.mrb[0].mxu0 %v1149
  %v1317 = vpop.f32.mrb[0].mxu0
  %v1318 = vadd.f32 %v1104, %v1317
  %v1319 = vpop.f32.mrb[0].mxu0
  %1320 = vmatprep.mubr.f32.mxu0 0.0
  %1321 = vmatmul.mubr.f32.gmra.mrb[0].mxu0 %v1152
  %v1322 = vpop.f32.mrb[0].mxu0
  %v1323 = vadd.f32 %v1104, %v1322
  %v1324 = vpop.f32.mrb[0].mxu0
  %1325 = vmatprep.mubr.f32.mxu0 0.0
  %1326 = vmatmul.mubr.f32.gmra.mrb[0].mxu0 %v1155
  %v1327 = vpop.f32.mrb[0].mxu0
  %v1328 = vadd.f32 %v1104, %v1327
  %v1329 = vpop.f32.mrb[0].mxu0
  %1330 = vmatprep.mubr.f32.mxu0 0.0
  %1331 = vmatmul.mubr.f32.gmra.mrb[0].mxu0 %v1158
  %v1332 = vpop.f32.mrb[0].mxu0
  %v1333 = vadd.f32 %v1104, %v1332
  %v1334 = vpop.f32.mrb[0].mxu0
  %1335 = vmatprep.mubr.f32.mxu0 0.0
  %1336 = vmatmul.mubr.f32.gmra.mrb[0].mxu0 %v1161
  %v1337 = vpop.f32.mrb[0].mxu0
  %v1338 = vadd.f32 %v1104, %v1337
  %v1339 = vpop.f32.mrb[0].mxu0
  %1340 = vmatprep.mubr.f32.mxu0 0.0
  %1341 = vmatmul.mubr.f32.gmra.mrb[0].mxu0 %v1164
  %v1342 = vpop.f32.mrb[0].mxu0
  %v1343 = vadd.f32 %v1104, %v1342
  %v1344 = vpop.f32.mrb[0].mxu0
  %1345 = vmatprep.mubr.f32.mxu0 0.0
  %1346 = vmatmul.mubr.f32.gmra.mrb[0].mxu0 %v1167
  %v1347 = vpop.f32.mrb[0].mxu0
  %v1348 = vadd.f32 %v1104, %v1347
  %v1349 = vpop.f32.mrb[0].mxu0
  %1350 = vmatprep.mubr.f32.mxu0 0.0
  %1351 = vmatmul.mubr.f32.gmra.mrb[0].mxu0 %v1170
  %v1352 = vpop.f32.mrb[0].mxu0
  %v1353 = vadd.f32 %v1104, %v1352
  %v1354 = vpop.f32.mrb[0].mxu0
  %1355 = vmatprep.mubr.f32.mxu0 0.0
  %1356 = vmatmul.mubr.f32.gmra.mrb[0].mxu0 %v1173
  %v1357 = vpop.f32.mrb[0].mxu0
  %v1358 = vadd.f32 %v1104, %v1357
  %v1359 = vpop.f32.mrb[0].mxu0
  %1360 = vmatprep.mubr.f32.mxu0 0.0
  %1361 = vmatmul.mubr.f32.gmra.mrb[0].mxu0 %v1176
  %v1362 = vpop.f32.mrb[0].mxu0
  %v1363 = vadd.f32 %v1104, %v1362
  %v1364 = vpop.f32.mrb[0].mxu0
  %1365 = vmatprep.mubr.f32.mxu0 0.0
  %1366 = vmatmul.mubr.f32.gmra.mrb[0].mxu0 %v1179
  %v1367 = vpop.f32.mrb[0].mxu0
  %v1368 = vadd.f32 %v1104, %v1367
  %v1369 = vpop.f32.mrb[0].mxu0
  %1370 = vdwg.mxu0
  %v1371 = vld [vmem:[%s1] sm:$0xff]
  %v1372 = vld [vmem:[%s1 + $0x8] sm:$0xff]
  %v1373 = vld [vmem:[%s1 + $0x10] sm:$0xff]
  %v1374 = vld [vmem:[%s1 + $0x18] sm:$0xff]
  %v1375 = vld [vmem:[%s1 + $0x20] sm:$0xff]
  %v1376 = vld [vmem:[%s1 + $0x28] sm:$0xff]
  %v1377 = vld [vmem:[%s1 + $0x30] sm:$0xff]
  %v1378 = vld [vmem:[%s1 + $0x38] sm:$0xff]
  %v1379 = vld [vmem:[%s1 + $0x40] sm:$0xff]
  %v1380 = vld [vmem:[%s1 + $0x48] sm:$0xff]
  %v1381 = vld [vmem:[%s1 + $0x50] sm:$0xff]
  %v1382 = vld [vmem:[%s1 + $0x58] sm:$0xff]
  %v1383 = vld [vmem:[%s1 + $0x60] sm:$0xff]
  %v1384 = vld [vmem:[%s1 + $0x68] sm:$0xff]
  %v1385 = vld [vmem:[%s1 + $0x70] sm:$0xff]
  %v1386 = vld [vmem:[%s1 + $0x78] sm:$0xff]
  %v1387 = vld [vmem:[%s1 + $0x80] sm:$0xff]
  %v1388 = vld [vmem:[%s1 + $0x88] sm:$0xff]
  %v1389 = vld [vmem:[%s1 + $0x90] sm:$0xff]
  %v1390 = vld [vmem:[%s1 + $0x98] sm:$0xff]
  %v1391 = vld [vmem:[%s1 + $0xa0] sm:$0xff]
  %v1392 = vld [vmem:[%s1 + $0xa8] sm:$0xff]
  %v1393 = vld [vmem:[%s1 + $0xb0] sm:$0xff]
  %v1394 = vld [vmem:[%s1 + $0xb8] sm:$0xff]
  %v1395 = vld [vmem:[%s1 + $0xc0] sm:$0xff]
  %v1396 = vmul.f32 %v1248, 0.5
  %v1397 = vmul.f32 %v1253, 0.5
  %v1398 = vmul.f32 %v1258, 0.5
  %v1399 = vmul.f32 %v1263, 0.5
  %v1400 = vmul.f32 %v1268, 0.5
  %v1401 = vmul.f32 %v1273, 0.5
  %v1402 = vmul.f32 %v1278, 0.5
  %v1403 = vmul.f32 %v1283, 0.5
  %v1404 = vmul.f32 %v1288, 0.5
  %v1405 = vmul.f32 %v1293, 0.5
  %v1406 = vmul.f32 %v1298, 0.5
  %v1407 = vmul.f32 %v1303, 0.5
  %v1408 = vmul.f32 %v1308, 0.5
  %v1409 = vmul.f32 %v1313, 0.5
  %v1410 = vmul.f32 %v1318, 0.5
  %v1411 = vmul.f32 %v1323, 0.5
  %v1412 = vmul.f32 %v1328, 0.5
  %v1413 = vmul.f32 %v1333, 0.5
  %v1414 = vmul.f32 %v1338, 0.5
  %v1415 = vmul.f32 %v1343, 0.5
  %v1416 = vmul.f32 %v1348, 0.5
  %v1417 = vmul.f32 %v1353, 0.5
  %v1418 = vmul.f32 %v1358, 0.5
  %v1419 = vmul.f32 %v1363, 0.5
  %v1420 = vmul.f32 %v1368, 0.5
  %v1421 = vmul.f32 %v1396, 1.442695
  %v1422 = vpow.pop %v1421
  %v1423 = vmul.f32 %v1397, 1.442695
  %v1424 = vpow.pop %v1423
  %v1425 = vmul.f32 %v1398, 1.442695
  %v1426 = vpow.pop %v1425
  %v1427 = vmul.f32 %v1399, 1.442695
  %v1428 = vpow.pop %v1427
  %v1429 = vmul.f32 %v1400, 1.442695
  %v1430 = vpow.pop %v1429
  %v1431 = vmul.f32 %v1401, 1.442695
  %v1432 = vpow.pop %v1431
  %v1433 = vmul.f32 %v1402, 1.442695
  %v1434 = vpow.pop %v1433
  %v1435 = vmul.f32 %v1403, 1.442695
  %v1436 = vpow.pop %v1435
  %v1437 = vmul.f32 %v1404, 1.442695
  %v1438 = vpow.pop %v1437
  %v1439 = vmul.f32 %v1405, 1.442695
  %v1440 = vpow.pop %v1439
  %v1441 = vmul.f32 %v1406, 1.442695
  %v1442 = vpow.pop %v1441
  %v1443 = vmul.f32 %v1407, 1.442695
  %v1444 = vpow.pop %v1443
  %v1445 = vmul.f32 %v1408, 1.442695
  %v1446 = vpow.pop %v1445
  %v1447 = vmul.f32 %v1409, 1.442695
  %v1448 = vpow.pop %v1447
  %v1449 = vmul.f32 %v1410, 1.442695
  %v1450 = vpow.pop %v1449
  %v1451 = vmul.f32 %v1411, 1.442695
  %v1452 = vpow.pop %v1451
  %v1453 = vmul.f32 %v1412, 1.442695
  %v1454 = vpow.pop %v1453
  %v1455 = vmul.f32 %v1413, 1.442695
  %v1456 = vpow.pop %v1455
  %v1457 = vmul.f32 %v1414, 1.442695
  %v1458 = vpow.pop %v1457
  %v1459 = vmul.f32 %v1415, 1.442695
  %v1460 = vpow.pop %v1459
  %v1461 = vmul.f32 %v1416, 1.442695
  %v1462 = vpow.pop %v1461
  %v1463 = vmul.f32 %v1417, 1.442695
  %v1464 = vpow.pop %v1463
  %v1465 = vmul.f32 %v1418, 1.442695
  %v1466 = vpow.pop %v1465
  %v1467 = vmul.f32 %v1419, 1.442695
  %v1468 = vpow.pop %v1467
  %v1469 = vmul.f32 %v1420, 1.442695
  %v1470 = vpow.pop %v1469
  %1496 = vrot.lane.b32.xlu0 %v1422, 124
  %v1497 = vpop.permute.xlu0 %1496
  %1498 = vrot.lane.b32.xlu0 %v1424, 124
  %v1499 = vpop.permute.xlu0 %1498
  %1500 = vrot.lane.b32.xlu0 %v1426, 124
  %v1501 = vpop.permute.xlu0 %1500
  %1502 = vrot.lane.b32.xlu0 %v1428, 124
  %v1503 = vpop.permute.xlu0 %1502
  %1504 = vrot.lane.b32.xlu0 %v1430, 124
  %v1505 = vpop.permute.xlu0 %1504
  %1506 = vrot.lane.b32.xlu0 %v1432, 124
  %v1507 = vpop.permute.xlu0 %1506
  %1508 = vrot.lane.b32.xlu0 %v1434, 124
  %v1509 = vpop.permute.xlu0 %1508
  %1510 = vrot.lane.b32.xlu0 %v1436, 124
  %v1511 = vpop.permute.xlu0 %1510
  %1512 = vrot.lane.b32.xlu0 %v1438, 124
  %v1513 = vpop.permute.xlu0 %1512
  %1514 = vrot.lane.b32.xlu0 %v1440, 124
  %v1515 = vpop.permute.xlu0 %1514
  %1516 = vrot.lane.b32.xlu0 %v1442, 124
  %v1517 = vpop.permute.xlu0 %1516
  %1518 = vrot.lane.b32.xlu0 %v1444, 124
  %v1519 = vpop.permute.xlu0 %1518
  %1520 = vrot.lane.b32.xlu0 %v1446, 124
  %v1521 = vpop.permute.xlu0 %1520
  %1522 = vrot.lane.b32.xlu0 %v1448, 124
  %v1523 = vpop.permute.xlu0 %1522
  %1524 = vrot.lane.b32.xlu0 %v1450, 124
  %v1525 = vpop.permute.xlu0 %1524
  %1526 = vrot.lane.b32.xlu0 %v1452, 124
  %v1527 = vpop.permute.xlu0 %1526
  %1528 = vrot.lane.b32.xlu0 %v1454, 124
  %v1529 = vpop.permute.xlu0 %1528
  %1530 = vrot.lane.b32.xlu0 %v1456, 124
  %v1531 = vpop.permute.xlu0 %1530
  %1532 = vrot.lane.b32.xlu0 %v1458, 124
  %v1533 = vpop.permute.xlu0 %1532
  %1534 = vrot.lane.b32.xlu0 %v1460, 124
  %v1535 = vpop.permute.xlu0 %1534
  %1536 = vrot.lane.b32.xlu0 %v1462, 124
  %v1537 = vpop.permute.xlu0 %1536
  %1538 = vrot.lane.b32.xlu0 %v1464, 124
  %v1539 = vpop.permute.xlu0 %1538
  %1540 = vrot.lane.b32.xlu0 %v1466, 124
  %v1541 = vpop.permute.xlu0 %1540
  %1542 = vrot.lane.b32.xlu0 %v1468, 124
  %v1543 = vpop.permute.xlu0 %1542
  %1544 = vrot.lane.b32.xlu0 %v1470, 124
  %v1545 = vpop.permute.xlu0 %1544
  %v1571 = vmul.f32 %v1371, %v1497
  %v1572 = vmul.f32 %v1372, %v1499
  %v1573 = vmul.f32 %v1373, %v1501
  %v1574 = vmul.f32 %v1374, %v1503
  %v1575 = vmul.f32 %v1375, %v1505
  %v1576 = vmul.f32 %v1376, %v1507
  %v1577 = vmul.f32 %v1377, %v1509
  %v1578 = vmul.f32 %v1378, %v1511
  %v1579 = vmul.f32 %v1379, %v1513
  %v1580 = vmul.f32 %v1380, %v1515
  %v1581 = vmul.f32 %v1381, %v1517
  %v1582 = vmul.f32 %v1382, %v1519
  %v1583 = vmul.f32 %v1383, %v1521
  %v1584 = vmul.f32 %v1384, %v1523
  %v1585 = vmul.f32 %v1385, %v1525
  %v1586 = vmul.f32 %v1386, %v1527
  %v1587 = vmul.f32 %v1387, %v1529
  %v1588 = vmul.f32 %v1388, %v1531
  %v1589 = vmul.f32 %v1389, %v1533
  %v1590 = vmul.f32 %v1390, %v1535
  %v1591 = vmul.f32 %v1391, %v1537
  %v1592 = vmul.f32 %v1392, %v1539
  %v1593 = vmul.f32 %v1393, %v1541
  %v1594 = vmul.f32 %v1394, %v1543
  %v1595 = vmul.f32 %v1395, %v1545
  %v1596 = vadd.f32 %v1571, %v1248
  %v1597 = vadd.f32 %v1572, %v1253
  %v1598 = vadd.f32 %v1573, %v1258
  %v1599 = vadd.f32 %v1574, %v1263
  %v1600 = vadd.f32 %v1575, %v1268
  %v1601 = vadd.f32 %v1576, %v1273
  %v1602 = vadd.f32 %v1577, %v1278
  %v1603 = vadd.f32 %v1578, %v1283
  %v1604 = vadd.f32 %v1579, %v1288
  %v1605 = vadd.f32 %v1580, %v1293
  %v1606 = vadd.f32 %v1581, %v1298
  %v1607 = vadd.f32 %v1582, %v1303
  %v1608 = vadd.f32 %v1583, %v1308
  %v1609 = vadd.f32 %v1584, %v1313
  %v1610 = vadd.f32 %v1585, %v1318
  %v1611 = vadd.f32 %v1586, %v1323
  %v1612 = vadd.f32 %v1587, %v1328
  %v1613 = vadd.f32 %v1588, %v1333
  %v1614 = vadd.f32 %v1589, %v1338
  %v1615 = vadd.f32 %v1590, %v1343
  %v1616 = vadd.f32 %v1591, %v1348
  %v1617 = vadd.f32 %v1592, %v1353
  %v1618 = vadd.f32 %v1593, %v1358
  %v1619 = vadd.f32 %v1594, %v1363
  %v1620 = vadd.f32 %v1595, %v1368
  %v1621 = vld [vmem:[%s2 + $0xb0] sm:$0xf]
  %v1622 = vld [vmem:[%s2 + $0xb4] sm:$0x1]
  %v1623 = vlaneseq
  %v1624 = vshrl.u32 %v1623, 7
  %v1625 = vsub.s32 0, %v1624
  %v1626 = vrot.slane %v1622, %v1625
  %vm1627 = vcmask 31744
  %v1629 = vsel %vm1627, %v1596, 0
  %v1632 = vsel %vm1627, %v1597, 0
  %v1635 = vsel %vm1627, %v1598, 0
  %v1638 = vsel %vm1627, %v1599, 0
  %v1641 = vsel %vm1627, %v1600, 0
  %v1644 = vsel %vm1627, %v1601, 0
  %v1647 = vsel %vm1627, %v1602, 0
  %v1650 = vsel %vm1627, %v1603, 0
  %v1653 = vsel %vm1627, %v1604, 0
  %v1656 = vsel %vm1627, %v1605, 0
  %v1659 = vsel %vm1627, %v1606, 0
  %v1662 = vsel %vm1627, %v1607, 0
  %v1665 = vsel %vm1627, %v1608, 0
  %v1668 = vsel %vm1627, %v1609, 0
  %v1671 = vsel %vm1627, %v1610, 0
  %v1674 = vsel %vm1627, %v1611, 0
  %v1677 = vsel %vm1627, %v1612, 0
  %v1680 = vsel %vm1627, %v1613, 0
  %v1683 = vsel %vm1627, %v1614, 0
  %v1686 = vsel %vm1627, %v1615, 0
  %v1689 = vsel %vm1627, %v1616, 0
  %v1692 = vsel %vm1627, %v1617, 0
  %v1695 = vsel %vm1627, %v1618, 0
  %v1698 = vsel %vm1627, %v1619, 0
  %v1701 = vsel %vm1627, %v1620, 0
  %vm1703 = vcmask 1043456
  %v1705 = vsel %vm1703, %v1621, 0
  %1707 = vmatprep.subr.mxu0 0.0
  %1708 = vmatpush1.msra.mxu0 %v1705
  %1709 = vmatprep.subr.mxu0 0.0
  %1710 = vmatpush1.msra.mxu0 0.0
  %1711 = vmatprep.subr.mxu0 0.0
  %1712 = vmatpush1.msra.mxu0 0.0
  %1713 = vmatprep.subr.mxu0 0.0
  %1714 = vmatpush1.msra.mxu0 0.0
  %1715 = vmatprep.subr.mxu0 0.0
  %1716 = vmatpush1.msra.mxu0 0.0
  %1717 = vmatprep.subr.mxu0 0.0
  %1718 = vmatpush1.msra.mxu0 0.0
  %1719 = vmatprep.subr.mxu0 0.0
  %1720 = vmatpush1.msra.mxu0 0.0
  %1721 = vmatprep.subr.mxu0 0.0
  %1722 = vmatpush1.msra.mxu0 0.0
  %1723 = vmatprep.subr.mxu0 0.0
  %1724 = vmatpush1.msra.mxu0 0.0
  %1725 = vmatprep.subr.mxu0 0.0
  %1726 = vmatpush1.msra.mxu0 0.0
  %1727 = vmatprep.subr.mxu0 0.0
  %1728 = vmatpush1.msra.mxu0 0.0
  %1729 = vmatprep.subr.mxu0 0.0
  %1730 = vmatpush1.msra.mxu0 0.0
  %1731 = vmatprep.subr.mxu0 0.0
  %1732 = vmatpush1.msra.mxu0 0.0
  %1733 = vmatprep.subr.mxu0 0.0
  %1734 = vmatpush1.msra.mxu0 0.0
  %1735 = vmatprep.subr.mxu0 0.0
  %1736 = vmatpush1.msra.mxu0 0.0
  %1737 = vmatprep.subr.mxu0 0.0
  %1738 = vmatpush1.msra.mxu0 0.0
  %1739 = vmatprep.subr.mxu0 0.0
  %1740 = vmatpush1.msra.mxu0 0.0
  %1741 = vmatprep.subr.mxu0 0.0
  %1742 = vmatpush1.msra.mxu0 0.0
  %1743 = vmatprep.subr.mxu0 0.0
  %1744 = vmatpush1.msra.mxu0 0.0
  %1745 = vmatprep.subr.mxu0 0.0
  %1746 = vmatpush1.msra.mxu0 0.0
  %1747 = vmatprep.subr.mxu0 0.0
  %1748 = vmatpush1.msra.mxu0 0.0
  %1749 = vmatprep.subr.mxu0 0.0
  %1750 = vmatpush1.msra.mxu0 0.0
  %1751 = vmatprep.subr.mxu0 0.0
  %1752 = vmatpush1.msra.mxu0 0.0
  %1753 = vmatprep.subr.mxu0 0.0
  %1754 = vmatpush1.msra.mxu0 0.0
  %1755 = vmatprep.subr.mxu0 0.0
  %1756 = vmatpush1.msra.mxu0 0.0
  %1757 = vmatprep.subr.mxu0 0.0
  %1758 = vmatpush1.msra.mxu0 0.0
  %1759 = vmatprep.subr.mxu0 0.0
  %1760 = vmatpush1.msra.mxu0 0.0
  %1761 = vmatprep.subr.mxu0 0.0
  %1762 = vmatpush1.msra.mxu0 0.0
  %1763 = vmatprep.subr.mxu0 0.0
  %1764 = vmatpush1.msra.mxu0 0.0
  %1765 = vmatprep.subr.mxu0 0.0
  %1766 = vmatpush1.msra.mxu0 0.0
  %1767 = vmatprep.subr.mxu0 0.0
  %1768 = vmatpush1.msra.mxu0 0.0
  %1769 = vmatprep.subr.mxu0 0.0
  %1770 = vmatpush1.msra.mxu0 0.0
  %1771 = vmatprep.mubr.f32.mxu0 0.0
  %1772 = vmatmul.mubr.f32.gmra.mrb[0].mxu0 %v1629
  %v1773 = vpop.f32.mrb[0].mxu0
  %v1774 = vadd.f32 %v1626, %v1773
  %v1775 = vpop.f32.mrb[0].mxu0
  %1776 = vmatprep.mubr.f32.mxu0 0.0
  %1777 = vmatmul.mubr.f32.gmra.mrb[0].mxu0 %v1632
  %v1778 = vpop.f32.mrb[0].mxu0
  %v1779 = vadd.f32 %v1626, %v1778
  %v1780 = vpop.f32.mrb[0].mxu0
  %1781 = vmatprep.mubr.f32.mxu0 0.0
  %1782 = vmatmul.mubr.f32.gmra.mrb[0].mxu0 %v1635
  %v1783 = vpop.f32.mrb[0].mxu0
  %v1784 = vadd.f32 %v1626, %v1783
  %v1785 = vpop.f32.mrb[0].mxu0
  %1786 = vmatprep.mubr.f32.mxu0 0.0
  %1787 = vmatmul.mubr.f32.gmra.mrb[0].mxu0 %v1638
  %v1788 = vpop.f32.mrb[0].mxu0
  %v1789 = vadd.f32 %v1626, %v1788
  %v1790 = vpop.f32.mrb[0].mxu0
  %1791 = vmatprep.mubr.f32.mxu0 0.0
  %1792 = vmatmul.mubr.f32.gmra.mrb[0].mxu0 %v1641
  %v1793 = vpop.f32.mrb[0].mxu0
  %v1794 = vadd.f32 %v1626, %v1793
  %v1795 = vpop.f32.mrb[0].mxu0
  %1796 = vmatprep.mubr.f32.mxu0 0.0
  %1797 = vmatmul.mubr.f32.gmra.mrb[0].mxu0 %v1644
  %v1798 = vpop.f32.mrb[0].mxu0
  %v1799 = vadd.f32 %v1626, %v1798
  %v1800 = vpop.f32.mrb[0].mxu0
  %1801 = vmatprep.mubr.f32.mxu0 0.0
  %1802 = vmatmul.mubr.f32.gmra.mrb[0].mxu0 %v1647
  %v1803 = vpop.f32.mrb[0].mxu0
  %v1804 = vadd.f32 %v1626, %v1803
  %v1805 = vpop.f32.mrb[0].mxu0
  %1806 = vmatprep.mubr.f32.mxu0 0.0
  %1807 = vmatmul.mubr.f32.gmra.mrb[0].mxu0 %v1650
  %v1808 = vpop.f32.mrb[0].mxu0
  %v1809 = vadd.f32 %v1626, %v1808
  %v1810 = vpop.f32.mrb[0].mxu0
  %1811 = vmatprep.mubr.f32.mxu0 0.0
  %1812 = vmatmul.mubr.f32.gmra.mrb[0].mxu0 %v1653
  %v1813 = vpop.f32.mrb[0].mxu0
  %v1814 = vadd.f32 %v1626, %v1813
  %v1815 = vpop.f32.mrb[0].mxu0
  %1816 = vmatprep.mubr.f32.mxu0 0.0
  %1817 = vmatmul.mubr.f32.gmra.mrb[0].mxu0 %v1656
  %v1818 = vpop.f32.mrb[0].mxu0
  %v1819 = vadd.f32 %v1626, %v1818
  %v1820 = vpop.f32.mrb[0].mxu0
  %1821 = vmatprep.mubr.f32.mxu0 0.0
  %1822 = vmatmul.mubr.f32.gmra.mrb[0].mxu0 %v1659
  %v1823 = vpop.f32.mrb[0].mxu0
  %v1824 = vadd.f32 %v1626, %v1823
  %v1825 = vpop.f32.mrb[0].mxu0
  %1826 = vmatprep.mubr.f32.mxu0 0.0
  %1827 = vmatmul.mubr.f32.gmra.mrb[0].mxu0 %v1662
  %v1828 = vpop.f32.mrb[0].mxu0
  %v1829 = vadd.f32 %v1626, %v1828
  %v1830 = vpop.f32.mrb[0].mxu0
  %1831 = vmatprep.mubr.f32.mxu0 0.0
  %1832 = vmatmul.mubr.f32.gmra.mrb[0].mxu0 %v1665
  %v1833 = vpop.f32.mrb[0].mxu0
  %v1834 = vadd.f32 %v1626, %v1833
  %v1835 = vpop.f32.mrb[0].mxu0
  %1836 = vmatprep.mubr.f32.mxu0 0.0
  %1837 = vmatmul.mubr.f32.gmra.mrb[0].mxu0 %v1668
  %v1838 = vpop.f32.mrb[0].mxu0
  %v1839 = vadd.f32 %v1626, %v1838
  %v1840 = vpop.f32.mrb[0].mxu0
  %1841 = vmatprep.mubr.f32.mxu0 0.0
  %1842 = vmatmul.mubr.f32.gmra.mrb[0].mxu0 %v1671
  %v1843 = vpop.f32.mrb[0].mxu0
  %v1844 = vadd.f32 %v1626, %v1843
  %v1845 = vpop.f32.mrb[0].mxu0
  %1846 = vmatprep.mubr.f32.mxu0 0.0
  %1847 = vmatmul.mubr.f32.gmra.mrb[0].mxu0 %v1674
  %v1848 = vpop.f32.mrb[0].mxu0
  %v1849 = vadd.f32 %v1626, %v1848
  %v1850 = vpop.f32.mrb[0].mxu0
  %1851 = vmatprep.mubr.f32.mxu0 0.0
  %1852 = vmatmul.mubr.f32.gmra.mrb[0].mxu0 %v1677
  %v1853 = vpop.f32.mrb[0].mxu0
  %v1854 = vadd.f32 %v1626, %v1853
  %v1855 = vpop.f32.mrb[0].mxu0
  %1856 = vmatprep.mubr.f32.mxu0 0.0
  %1857 = vmatmul.mubr.f32.gmra.mrb[0].mxu0 %v1680
  %v1858 = vpop.f32.mrb[0].mxu0
  %v1859 = vadd.f32 %v1626, %v1858
  %v1860 = vpop.f32.mrb[0].mxu0
  %1861 = vmatprep.mubr.f32.mxu0 0.0
  %1862 = vmatmul.mubr.f32.gmra.mrb[0].mxu0 %v1683
  %v1863 = vpop.f32.mrb[0].mxu0
  %v1864 = vadd.f32 %v1626, %v1863
  %v1865 = vpop.f32.mrb[0].mxu0
  %1866 = vmatprep.mubr.f32.mxu0 0.0
  %1867 = vmatmul.mubr.f32.gmra.mrb[0].mxu0 %v1686
  %v1868 = vpop.f32.mrb[0].mxu0
  %v1869 = vadd.f32 %v1626, %v1868
  %v1870 = vpop.f32.mrb[0].mxu0
  %1871 = vmatprep.mubr.f32.mxu0 0.0
  %1872 = vmatmul.mubr.f32.gmra.mrb[0].mxu0 %v1689
  %v1873 = vpop.f32.mrb[0].mxu0
  %v1874 = vadd.f32 %v1626, %v1873
  %v1875 = vpop.f32.mrb[0].mxu0
  %1876 = vmatprep.mubr.f32.mxu0 0.0
  %1877 = vmatmul.mubr.f32.gmra.mrb[0].mxu0 %v1692
  %v1878 = vpop.f32.mrb[0].mxu0
  %v1879 = vadd.f32 %v1626, %v1878
  %v1880 = vpop.f32.mrb[0].mxu0
  %1881 = vmatprep.mubr.f32.mxu0 0.0
  %1882 = vmatmul.mubr.f32.gmra.mrb[0].mxu0 %v1695
  %v1883 = vpop.f32.mrb[0].mxu0
  %v1884 = vadd.f32 %v1626, %v1883
  %v1885 = vpop.f32.mrb[0].mxu0
  %1886 = vmatprep.mubr.f32.mxu0 0.0
  %1887 = vmatmul.mubr.f32.gmra.mrb[0].mxu0 %v1698
  %v1888 = vpop.f32.mrb[0].mxu0
  %v1889 = vadd.f32 %v1626, %v1888
  %v1890 = vpop.f32.mrb[0].mxu0
  %1891 = vmatprep.mubr.f32.mxu0 0.0
  %1892 = vmatmul.mubr.f32.gmra.mrb[0].mxu0 %v1701
  %v1893 = vpop.f32.mrb[0].mxu0
  %v1894 = vadd.f32 %v1626, %v1893
  %v1895 = vpop.f32.mrb[0].mxu0
  %1896 = vdwg.mxu0
  %1922 = vrot.lane.b32.xlu0 %v1248, 4
  %v1923 = vpop.permute.xlu0 %1922
  %1924 = vrot.lane.b32.xlu0 %v1253, 4
  %v1925 = vpop.permute.xlu0 %1924
  %1926 = vrot.lane.b32.xlu0 %v1258, 4
  %v1927 = vpop.permute.xlu0 %1926
  %1928 = vrot.lane.b32.xlu0 %v1263, 4
  %v1929 = vpop.permute.xlu0 %1928
  %1930 = vrot.lane.b32.xlu0 %v1268, 4
  %v1931 = vpop.permute.xlu0 %1930
  %1932 = vrot.lane.b32.xlu0 %v1273, 4
  %v1933 = vpop.permute.xlu0 %1932
  %1934 = vrot.lane.b32.xlu0 %v1278, 4
  %v1935 = vpop.permute.xlu0 %1934
  %1936 = vrot.lane.b32.xlu0 %v1283, 4
  %v1937 = vpop.permute.xlu0 %1936
  %1938 = vrot.lane.b32.xlu0 %v1288, 4
  %v1939 = vpop.permute.xlu0 %1938
  %1940 = vrot.lane.b32.xlu0 %v1293, 4
  %v1941 = vpop.permute.xlu0 %1940
  %1942 = vrot.lane.b32.xlu0 %v1298, 4
  %v1943 = vpop.permute.xlu0 %1942
  %1944 = vrot.lane.b32.xlu0 %v1303, 4
  %v1945 = vpop.permute.xlu0 %1944
  %1946 = vrot.lane.b32.xlu0 %v1308, 4
  %v1947 = vpop.permute.xlu0 %1946
  %1948 = vrot.lane.b32.xlu0 %v1313, 4
  %v1949 = vpop.permute.xlu0 %1948
  %1950 = vrot.lane.b32.xlu0 %v1318, 4
  %v1951 = vpop.permute.xlu0 %1950
  %1952 = vrot.lane.b32.xlu0 %v1323, 4
  %v1953 = vpop.permute.xlu0 %1952
  %1954 = vrot.lane.b32.xlu0 %v1328, 4
  %v1955 = vpop.permute.xlu0 %1954
  %1956 = vrot.lane.b32.xlu0 %v1333, 4
  %v1957 = vpop.permute.xlu0 %1956
  %1958 = vrot.lane.b32.xlu0 %v1338, 4
  %v1959 = vpop.permute.xlu0 %1958
  %1960 = vrot.lane.b32.xlu0 %v1343, 4
  %v1961 = vpop.permute.xlu0 %1960
  %1962 = vrot.lane.b32.xlu0 %v1348, 4
  %v1963 = vpop.permute.xlu0 %1962
  %1964 = vrot.lane.b32.xlu0 %v1353, 4
  %v1965 = vpop.permute.xlu0 %1964
  %1966 = vrot.lane.b32.xlu0 %v1358, 4
  %v1967 = vpop.permute.xlu0 %1966
  %1968 = vrot.lane.b32.xlu0 %v1363, 4
  %v1969 = vpop.permute.xlu0 %1968
  %1970 = vrot.lane.b32.xlu0 %v1368, 4
  %v1971 = vpop.permute.xlu0 %1970
  %v1997 = vsel %vm1627, %v1774, %v1923
  %v1998 = vsel %vm1627, %v1779, %v1925
  %v1999 = vsel %vm1627, %v1784, %v1927
  %v2000 = vsel %vm1627, %v1789, %v1929
  %v2001 = vsel %vm1627, %v1794, %v1931
  %v2002 = vsel %vm1627, %v1799, %v1933
  %v2003 = vsel %vm1627, %v1804, %v1935
  %v2004 = vsel %vm1627, %v1809, %v1937
  %v2005 = vsel %vm1627, %v1814, %v1939
  %v2006 = vsel %vm1627, %v1819, %v1941
  %v2007 = vsel %vm1627, %v1824, %v1943
  %v2008 = vsel %vm1627, %v1829, %v1945
  %v2009 = vsel %vm1627, %v1834, %v1947
  %v2010 = vsel %vm1627, %v1839, %v1949
  %v2011 = vsel %vm1627, %v1844, %v1951
  %v2012 = vsel %vm1627, %v1849, %v1953
  %v2013 = vsel %vm1627, %v1854, %v1955
  %v2014 = vsel %vm1627, %v1859, %v1957
  %v2015 = vsel %vm1627, %v1864, %v1959
  %v2016 = vsel %vm1627, %v1869, %v1961
  %v2017 = vsel %vm1627, %v1874, %v1963
  %v2018 = vsel %vm1627, %v1879, %v1965
  %v2019 = vsel %vm1627, %v1884, %v1967
  %v2020 = vsel %vm1627, %v1889, %v1969
  %v2021 = vsel %vm1627, %v1894, %v1971
  %vm2022 = vcmask 97280
  %2023 = vst.msk [vmem:[%s3] sm:$0xff] %vm2022, %v1997
  %2024 = vst.msk [vmem:[%s3 + $0x8] sm:$0xff] %vm2022, %v1998
  %2025 = vst.msk [vmem:[%s3 + $0x10] sm:$0xff] %vm2022, %v1999
  %2026 = vst.msk [vmem:[%s3 + $0x18] sm:$0xff] %vm2022, %v2000
  %2027 = vst.msk [vmem:[%s3 + $0x20] sm:$0xff] %vm2022, %v2001
  %2028 = vst.msk [vmem:[%s3 + $0x28] sm:$0xff] %vm2022, %v2002
  %2029 = vst.msk [vmem:[%s3 + $0x30] sm:$0xff] %vm2022, %v2003
  %2030 = vst.msk [vmem:[%s3 + $0x38] sm:$0xff] %vm2022, %v2004
  %2031 = vst.msk [vmem:[%s3 + $0x40] sm:$0xff] %vm2022, %v2005
  %2032 = vst.msk [vmem:[%s3 + $0x48] sm:$0xff] %vm2022, %v2006
  %2033 = vst.msk [vmem:[%s3 + $0x50] sm:$0xff] %vm2022, %v2007
  %2034 = vst.msk [vmem:[%s3 + $0x58] sm:$0xff] %vm2022, %v2008
  %2035 = vst.msk [vmem:[%s3 + $0x60] sm:$0xff] %vm2022, %v2009
  %2036 = vst.msk [vmem:[%s3 + $0x68] sm:$0xff] %vm2022, %v2010
  %2037 = vst.msk [vmem:[%s3 + $0x70] sm:$0xff] %vm2022, %v2011
  %2038 = vst.msk [vmem:[%s3 + $0x78] sm:$0xff] %vm2022, %v2012
  %2039 = vst.msk [vmem:[%s3 + $0x80] sm:$0xff] %vm2022, %v2013
  %2040 = vst.msk [vmem:[%s3 + $0x88] sm:$0xff] %vm2022, %v2014
  %2041 = vst.msk [vmem:[%s3 + $0x90] sm:$0xff] %vm2022, %v2015
  %2042 = vst.msk [vmem:[%s3 + $0x98] sm:$0xff] %vm2022, %v2016
  %2043 = vst.msk [vmem:[%s3 + $0xa0] sm:$0xff] %vm2022, %v2017
  %2044 = vst.msk [vmem:[%s3 + $0xa8] sm:$0xff] %vm2022, %v2018
  %2045 = vst.msk [vmem:[%s3 + $0xb0] sm:$0xff] %vm2022, %v2019
  %2046 = vst.msk [vmem:[%s3 + $0xb8] sm:$0xff] %vm2022, %v2020
  %2047 = vst.msk [vmem:[%s3 + $0xc0] sm:$0xff] %vm2022, %v2021
  // Predicated region
  $region14: #{tpu_custom_call.1} parent=0 // pred_check
    _
  $region15: #{tpu_custom_call.1} parent=0 // pred_check_branch
    %2049 = sbr.rel (0) target = $region17
  $region16: #{tpu_custom_call.1} parent=0 // pred_region
    _
  $region17: #{tpu_custom_call.1} parent=0 // pred_fallthru
    _
  // Predicated region
  $region18: #{tpu_custom_call.1} parent=0 // pred_check
    _
  $region19: #{tpu_custom_call.1} parent=0 // pred_check_branch
    %2051 = sbr.rel (0) target = $region21
  $region20: #{tpu_custom_call.1} parent=0 // pred_region
    _
  $region21: #{tpu_custom_call.1} parent=0 // pred_fallthru
    _

</llo_original>
